<compile_context>
chip_gen: v7x
topology: tpu7x:2x2x1
jax: 0.10.0
libtpu: 0.0.40
codegen_flags: <defaults>
</compile_context>

<pallas_src>
import functools
import math

import jax
import jax.numpy as jnp
from jax.experimental import pallas as pl
from jax.experimental.pallas import tpu as pltpu  # noqa: F401  (TPU backend assumed)

# ----------------------------- configuration --------------------------------
C_IN = 3                  # image channels
H_IMG, W_IMG = 12, 16     # raw image spatial size (padded to 16x16 square)
PATCH = 8                 # patch size  -> 2x2 = 4 patches
V_DIM = 32                # vision hidden size
HEADS = 4
HEAD_DIM = V_DIM // HEADS
MLP_DIM = 64              # vision MLP intermediate
N_LAYERS = 2              # vision encoder layers in the synthetic model
N_USED = N_LAYERS - 1     # select_layer=-2 -> final layer is dead, never packed
T_DIM = 64                # text hidden size (mm_projector output)
PATCH_DIM = C_IN * PATCH * PATCH   # 192

IMAGE_MEAN = [0.48145466, 0.4578275, 0.40821073]
IMAGE_STD = [0.26862954, 0.26130258, 0.27577711]
RESCALE = 1.0 / 255.0
LN_EPS = 1e-5


# ------------------------- fused vision-tower kernel -------------------------
def _fused_tower_kernel(x_ref, w_ref, wqkv_ref, fb_ref, o_ref, *, n_used, s_real):
    """One kernel for: patch-embed + CLS/pos add -> pre-LN -> N_USED encoder
    layers (LN1 -> lane-aligned fused QKV -> per-head attention accumulated
    through Wo -> residual -> LN2 -> MLP -> residual) == hidden_states[-2]
    -> mm_projector.  All activations stay in VMEM; layers/heads are statically
    unrolled; weights arrive as 3 pre-packed lane-dense slabs."""
    d_model = V_DIM
    s_pad = x_ref.shape[0]

    def ln(x, g, b):
        mu = jnp.mean(x, axis=-1, keepdims=True)
        var = jnp.mean(jnp.square(x - mu), axis=-1, keepdims=True)
        return (x - mu) * jax.lax.rsqrt(var + LN_EPS) * g + b

    def bf(x):                      # matmul operands in bf16, accumulate in f32
        return x.astype(jnp.bfloat16)

    def frow(r, w=128):             # one f32 row of the bias/LN slab
        return fb_ref[r:r + 1, 0:w]

    # key-padding bias generated in-kernel (s_real is static): 0 for valid keys,
    # -1e30 for padded key columns.
    col_ids = jax.lax.broadcasted_iota(jnp.int32, (1, s_pad), 1)
    key_bias = jnp.where(col_ids < s_real, jnp.float32(0.0), jnp.float32(-1e30))

    # ---- patch embedding (conv as matmul) + CLS/pos add + CLIP pre_layrnorm ----
    add_term = fb_ref[0:s_pad, 0:d_model]                 # (s_pad, 32) f32
    pre_g = frow(s_pad + 0, d_model)
    pre_b = frow(s_pad + 1, d_model)
    patch_w = w_ref[0:PATCH_DIM, 0:d_model]               # (192, 32) bf16
    hidden = jnp.dot(bf(x_ref[...]), patch_w, preferred_element_type=jnp.float32)
    hidden = ln(hidden + add_term, pre_g, pre_b)

    for l in range(n_used):                               # static unroll
        wrow = PATCH_DIM + 128 * l                        # weight-slab row base
        fbase = s_pad + 2 + 10 * l                        # bias-slab row base
        ln1_g = frow(fbase + 0, d_model); ln1_b = frow(fbase + 1, d_model)
        bq = frow(fbase + 2, d_model)                     # already pre-scaled
        bk = frow(fbase + 3, d_model)
        bv = frow(fbase + 4, d_model)
        bo = frow(fbase + 5, d_model)
        ln2_g = frow(fbase + 6, d_model); ln2_b = frow(fbase + 7, d_model)
        fc1_b = frow(fbase + 8, MLP_DIM); fc2_b = frow(fbase + 9, d_model)

        # ---- self-attention block ----
        res = hidden
        h = ln(hidden, ln1_g, ln1_b)
        # lane-aligned fused QKV: Wq*scale | Wk | Wv each padded to 128 cols,
        # so q/k/v slices start at vreg boundaries (0 / 128 / 256).
        qkv = jnp.dot(bf(h), wqkv_ref[32 * l:32 * (l + 1), :],
                      preferred_element_type=jnp.float32)            # (s_pad, 384)
        q = qkv[:, 0:d_model] + bq
        k = qkv[:, 128:128 + d_model] + bk
        v = qkv[:, 256:256 + d_model] + bv

        # residual + output bias; heads accumulate through Wo (no lane concat)
        hidden = res + bo
        for hh in range(HEADS):                           # static unroll, no grid
            sl = slice(hh * HEAD_DIM, (hh + 1) * HEAD_DIM)
            s = jax.lax.dot_general(bf(q[:, sl]), bf(k[:, sl]),
                                    (((1,), (1,)), ((), ())),
                                    preferred_element_type=jnp.float32)
            s = s + key_bias                              # mask padded key columns
            s = s - jnp.max(s, axis=-1, keepdims=True)
            p = jnp.exp(s)
            p = p * pl.reciprocal(jnp.sum(p, axis=-1, keepdims=True), approx=True)
            ho = jnp.dot(bf(p), bf(v[:, sl]), preferred_element_type=jnp.float32)
            wo_h = w_ref[wrow + hh * HEAD_DIM: wrow + (hh + 1) * HEAD_DIM,
                         0:d_model]                       # (8, 32) bf16
            hidden = hidden + jnp.dot(bf(ho), wo_h,
                                      preferred_element_type=jnp.float32)

        # ---- MLP block (CLIP quick_gelu) ----
        res = hidden
        h = ln(hidden, ln2_g, ln2_b)
        fc1_w = w_ref[wrow + 32:wrow + 64, 0:MLP_DIM]     # (32, 64) bf16
        h = jnp.dot(bf(h), fc1_w, preferred_element_type=jnp.float32) + fc1_b
        h = h * jax.nn.sigmoid(1.702 * h)
        fc2_w = w_ref[wrow + 64:wrow + 128, 0:d_model]    # (64, 32) bf16
        hidden = res + jnp.dot(bf(h), fc2_w,
                               preferred_element_type=jnp.float32) + fc2_b

    # hidden == hidden_states[-2]: the final encoder layer is dead for
    # select_layer=-2 and was never packed/traced.

    # mm_projector: Linear -> GELU -> Linear (output lane-padded to 128 cols;
    # CLS/padded rows + lane padding sliced off host-side).
    pj_row = PATCH_DIM + 128 * n_used
    pb_row = s_pad + 2 + 10 * n_used
    pj_w1 = w_ref[pj_row:pj_row + 32, 0:T_DIM]            # (32, 64) bf16
    pj_w2 = w_ref[pj_row + 32:pj_row + 96, :]             # (64, 128) bf16, cols 64: zero
    pj_b1 = frow(pb_row + 0, T_DIM)
    pj_b2 = frow(pb_row + 1, 128)
    p1 = jnp.dot(bf(hidden), pj_w1, preferred_element_type=jnp.float32) + pj_b1
    # TODO(synk): exact erf-GELU of nn.GELU replaced with tanh-approx GELU.
    p1 = jax.nn.gelu(p1, approximate=True)
    o_ref[...] = jnp.dot(bf(p1), pj_w2, preferred_element_type=jnp.float32) + pj_b2


# ------------------------------ parameter init -------------------------------
def init_params(key):
    def nrm(key, shape, scale=0.02):
        return scale * jax.random.normal(key, shape, jnp.float32)

    keys = iter(jax.random.split(key, 64))
    p = {}
    # vision embeddings
    p["patch_w"] = nrm(next(keys), (PATCH_DIM, V_DIM))   # conv as matmul (no bias)
    p["cls"] = nrm(next(keys), (1, V_DIM))
    seq = (16 // PATCH) ** 2 + 1
    p["pos"] = nrm(next(keys), (seq, V_DIM))
    p["pre_ln_g"] = jnp.ones((V_DIM,), jnp.float32)
    p["pre_ln_b"] = jnp.zeros((V_DIM,), jnp.float32)
    # encoder layers (the synthetic model has N_LAYERS; only N_USED are live)
    layers = []
    for _ in range(N_LAYERS):
        layers.append({
            "ln1_g": jnp.ones((V_DIM,), jnp.float32),
            "ln1_b": jnp.zeros((V_DIM,), jnp.float32),
            "wq": nrm(next(keys), (V_DIM, V_DIM)), "bq": jnp.zeros((V_DIM,), jnp.float32),
            "wk": nrm(next(keys), (V_DIM, V_DIM)), "bk": jnp.zeros((V_DIM,), jnp.float32),
            "wv": nrm(next(keys), (V_DIM, V_DIM)), "bv": jnp.zeros((V_DIM,), jnp.float32),
            "wo": nrm(next(keys), (V_DIM, V_DIM)), "bo": jnp.zeros((V_DIM,), jnp.float32),
            "ln2_g": jnp.ones((V_DIM,), jnp.float32),
            "ln2_b": jnp.zeros((V_DIM,), jnp.float32),
            "fc1_w": nrm(next(keys), (V_DIM, MLP_DIM)), "fc1_b": jnp.zeros((MLP_DIM,), jnp.float32),
            "fc2_w": nrm(next(keys), (MLP_DIM, V_DIM)), "fc2_b": jnp.zeros((V_DIM,), jnp.float32),
        })
    p["layers"] = layers
    # mm_projector: Linear(V_DIM -> T_DIM), GELU, Linear(T_DIM -> T_DIM)
    p["proj_w1"] = nrm(next(keys), (V_DIM, T_DIM)); p["proj_b1"] = jnp.zeros((T_DIM,), jnp.float32)
    p["proj_w2"] = nrm(next(keys), (T_DIM, T_DIM)); p["proj_b2"] = jnp.zeros((T_DIM,), jnp.float32)
    return p


def pack_params(params):
    """One-time packing of all live parameters into 3 lane-dense slabs:
       w128  (R, 128)       bf16 : patch_w | per-layer [wo|fc1_w|fc2_w] | proj_w1 | proj_w2
       wqkv  (32*N_USED,384) bf16: per-layer [Wq*scale | Wk | Wv], each padded to 128 cols
       fbias (R, 128)       f32  : CLS/pos add rows, LN params, biases (bq pre-scaled)
    The dead final encoder layer is NOT packed (select_layer = -2)."""
    scale = 1.0 / math.sqrt(HEAD_DIM)

    def pad_cols(x, cols=128):
        return jnp.pad(x, ((0, 0), (0, cols - x.shape[1])))

    def row(v, cols=128):
        return pad_cols(v.reshape(1, -1), cols)

    # ---- bf16 weight slab, width 128 ----
    blocks = [pad_cols(params["patch_w"])]
    for l in range(N_USED):
        layer = params["layers"][l]
        blocks += [pad_cols(layer["wo"]), pad_cols(layer["fc1_w"]), pad_cols(layer["fc2_w"])]
    blocks += [pad_cols(params["proj_w1"]), pad_cols(params["proj_w2"])]
    w128 = jnp.concatenate(blocks, axis=0).astype(jnp.bfloat16)

    # ---- bf16 lane-aligned fused-QKV slab (scale folded into Wq) ----
    qkv_blocks = []
    for l in range(N_USED):
        layer = params["layers"][l]
        qkv_blocks.append(jnp.concatenate(
            [pad_cols(layer["wq"] * scale), pad_cols(layer["wk"]), pad_cols(layer["wv"])],
            axis=1))
    wqkv = jnp.concatenate(qkv_blocks, axis=0).astype(jnp.bfloat16)

    # ---- f32 bias / LN slab, width 128 ----
    seq = (16 // PATCH) ** 2 + 1                       # CLS + patches
    s_pad = max(8, ((seq + 7) // 8) * 8)
    add = jnp.zeros((s_pad, V_DIM), jnp.float32)
    add = add.at[0].set(params["cls"][0] + params["pos"][0])
    add = add.at[1:seq].set(params["pos"][1:seq])

    frows = [pad_cols(add), row(params["pre_ln_g"]), row(params["pre_ln_b"])]
    for l in range(N_USED):
        layer = params["layers"][l]
        frows += [row(layer["ln1_g"]), row(layer["ln1_b"]),
                  row(layer["bq"] * scale), row(layer["bk"]), row(layer["bv"]),
                  row(layer["bo"]), row(layer["ln2_g"]), row(layer["ln2_b"]),
                  row(layer["fc1_b"]), row(layer["fc2_b"])]
    frows += [row(params["proj_b1"]), row(params["proj_b2"])]
    fbias = jnp.concatenate(frows, axis=0).astype(jnp.float32)

    return {"w128": w128, "wqkv": wqkv, "fbias": fbias}


# ------------------------------- forward pass --------------------------------
def image_preprocess(img):
    """img: (C, H, W) with pixel values in [0, 255]. Mirrors Llava.image_preprocess.
    Done in plain JAX: a 3x256 elementwise op is below the kernel-launch floor."""
    C, H, W = img.shape
    w = max(H, W)
    v_padding = (w - H) / 2
    h_padding = (w - W) / 2
    l_pad = int(math.ceil(h_padding))
    t_pad = int(math.ceil(v_padding))
    r_pad = int(math.floor(h_padding))
    b_pad = int(math.floor(v_padding))
    padded = jnp.stack(
        [jnp.pad(img[c], ((t_pad, b_pad), (l_pad, r_pad)),
                 constant_values=float(int(IMAGE_MEAN[c] * 255)))
         for c in range(C)], axis=0)
    mean = jnp.asarray(IMAGE_MEAN, jnp.float32).reshape(C, 1, 1)
    std = jnp.asarray(IMAGE_STD, jnp.float32).reshape(C, 1, 1)
    return (padded * RESCALE - mean) / std             # (C, w, w)


def llava_forward(packed, images):
    """images: (C, H, W) uint8-range float. Returns (1, num_patches, T_DIM)."""
    pixel = image_preprocess(images)                   # (C, 16, 16) normalized
    C, Hp, Wp = pixel.shape
    gh, gw = Hp // PATCH, Wp // PATCH
    n_patch = gh * gw
    patches = pixel.reshape(C, gh, PATCH, gw, PATCH).transpose(1, 3, 0, 2, 4)
    patches = patches.reshape(n_patch, C * PATCH * PATCH)

    s_real = n_patch + 1                               # CLS + patches
    s_pad = max(8, ((s_real + 7) // 8) * 8)            # pad seq to full sublanes

    # patches at rows 1..n_patch; row 0 reserved for CLS; tail rows zero
    x_in = jnp.zeros((s_pad, C * PATCH * PATCH), jnp.float32)
    x_in = x_in.at[1:1 + n_patch].set(patches)

    out_padded = pl.pallas_call(
        functools.partial(_fused_tower_kernel, n_used=N_USED, s_real=s_real),
        out_shape=jax.ShapeDtypeStruct((s_pad, 128), jnp.float32),
    )(x_in, packed["w128"], packed["wqkv"], packed["fbias"])

    feats = out_padded[1:s_real, :T_DIM]               # drop CLS, seq + lane padding
    return feats[None]                                 # (1, num_patches, T_DIM)


# ----------------------------------- main ------------------------------------
if __name__ == "__main__":
    key = jax.random.PRNGKey(0)
    k_param, k_img = jax.random.split(key)
    params = init_params(k_param)
    packed = pack_params(params)                       # one-time slab packing
    # synthetic image with pixel values in [0, 255], NCHW single-image (C, H, W)
    images = jax.random.uniform(k_img, (C_IN, H_IMG, W_IMG), jnp.float32,
                                minval=0.0, maxval=255.0)
    fwd = jax.jit(llava_forward)
    out = jax.block_until_ready(fwd(packed, images))
    assert out.shape == (1, (16 // PATCH) ** 2, T_DIM)
    assert bool(jnp.all(jnp.isfinite(out)))
    print("KERNEL_OK")
</pallas_src>

<mosaic_0001>
module attributes {stable_mosaic.version = 11 : i64} {
  func.func @_fused_tower_kernel(%arg0: memref<8x192xf32, #tpu.memory_space<vmem>>, %arg1: memref<416x128xbf16, #tpu.memory_space<vmem>>, %arg2: memref<32x384xbf16, #tpu.memory_space<vmem>>, %arg3: memref<22x128xf32, #tpu.memory_space<vmem>>, %arg4: memref<8x128xf32, #tpu.memory_space<vmem>>) attributes {dimension_semantics = [], scalar_prefetch = 0 : i64, scratch_operands = 0 : i64, tpu.core_type = #tpu.core_type<tc>} {
    %0 = tpu.iota {dimensions = array<i32: 1>} : vector<1x8xi32>
    %c5_i32 = arith.constant 5 : i32
    %1 = vector.broadcast %c5_i32 : i32 to vector<1x8xi32>
    %2 = arith.cmpi slt, %0, %1 : vector<1x8xi32>
    %cst = arith.constant 0.000000e+00 : f32
    %cst_0 = arith.constant -1.000000e+30 : f32
    %3 = vector.broadcast %cst : f32 to vector<1x8xf32>
    %4 = vector.broadcast %cst_0 : f32 to vector<1x8xf32>
    %5 = arith.select %2, %3, %4 : vector<1x8xi1>, vector<1x8xf32>
    %c0 = arith.constant 0 : index
    %c0_1 = arith.constant 0 : index
    %6 = vector.load %arg3[%c0, %c0_1] : memref<22x128xf32, #tpu.memory_space<vmem>>, vector<8x32xf32>
    %c8 = arith.constant 8 : index
    %c0_2 = arith.constant 0 : index
    %7 = vector.load %arg3[%c8, %c0_2] : memref<22x128xf32, #tpu.memory_space<vmem>>, vector<1x32xf32>
    %c9 = arith.constant 9 : index
    %c0_3 = arith.constant 0 : index
    %8 = vector.load %arg3[%c9, %c0_3] : memref<22x128xf32, #tpu.memory_space<vmem>>, vector<1x32xf32>
    %c0_4 = arith.constant 0 : index
    %c0_5 = arith.constant 0 : index
    %9 = vector.load %arg1[%c0_4, %c0_5] : memref<416x128xbf16, #tpu.memory_space<vmem>>, vector<192x32xbf16>
    %c0_6 = arith.constant 0 : index
    %c0_7 = arith.constant 0 : index
    %10 = vector.load %arg0[%c0_6, %c0_7] : memref<8x192xf32, #tpu.memory_space<vmem>>, vector<8x192xf32>
    %11 = arith.truncf %10 : vector<8x192xf32> to vector<8x192xbf16>
    %cst_8 = arith.constant dense<0.000000e+00> : vector<8x32xf32>
    %12 = tpu.matmul %11, %9, %cst_8 {dimension_numbers = #tpu.dot_dimension_numbers<[1], [0], [0], [1], [0, 0, 1, 1], [], []>} : vector<8x192xbf16>, vector<192x32xbf16>, vector<8x32xf32> -> vector<8x32xf32>
    %13 = arith.addf %12, %6 : vector<8x32xf32>
    %cst_9 = arith.constant dense<0.000000e+00> : vector<8xf32>
    %14 = vector.multi_reduction <add>, %13, %cst_9 [1] : vector<8x32xf32> to vector<8xf32>
    %15 = vector.shape_cast %14 : vector<8xf32> to vector<8x1xf32>
    %cst_10 = arith.constant 3.200000e+01 : f32
    %16 = vector.broadcast %cst_10 : f32 to vector<8x1xf32>
    %17 = arith.divf %15, %16 : vector<8x1xf32>
    %18 = vector.broadcast %17 : vector<8x1xf32> to vector<8x32xf32>
    %19 = arith.subf %13, %18 : vector<8x32xf32>
    %20 = arith.mulf %19, %19 : vector<8x32xf32>
    %cst_11 = arith.constant dense<0.000000e+00> : vector<8xf32>
    %21 = vector.multi_reduction <add>, %20, %cst_11 [1] : vector<8x32xf32> to vector<8xf32>
    %22 = vector.shape_cast %21 : vector<8xf32> to vector<8x1xf32>
    %cst_12 = arith.constant 3.200000e+01 : f32
    %23 = vector.broadcast %cst_12 : f32 to vector<8x1xf32>
    %24 = arith.divf %22, %23 : vector<8x1xf32>
    %25 = vector.broadcast %17 : vector<8x1xf32> to vector<8x32xf32>
    %26 = arith.subf %13, %25 : vector<8x32xf32>
    %cst_13 = arith.constant 9.99999974E-6 : f32
    %27 = vector.broadcast %cst_13 : f32 to vector<8x1xf32>
    %28 = arith.addf %24, %27 : vector<8x1xf32>
    %29 = math.rsqrt %28 : vector<8x1xf32>
    %30 = vector.broadcast %29 : vector<8x1xf32> to vector<8x32xf32>
    %31 = arith.mulf %26, %30 : vector<8x32xf32>
    %32 = vector.broadcast %7 : vector<1x32xf32> to vector<8x32xf32>
    %33 = arith.mulf %31, %32 : vector<8x32xf32>
    %34 = vector.broadcast %8 : vector<1x32xf32> to vector<8x32xf32>
    %35 = arith.addf %33, %34 : vector<8x32xf32>
    %c10 = arith.constant 10 : index
    %c0_14 = arith.constant 0 : index
    %36 = vector.load %arg3[%c10, %c0_14] : memref<22x128xf32, #tpu.memory_space<vmem>>, vector<1x32xf32>
    %c11 = arith.constant 11 : index
    %c0_15 = arith.constant 0 : index
    %37 = vector.load %arg3[%c11, %c0_15] : memref<22x128xf32, #tpu.memory_space<vmem>>, vector<1x32xf32>
    %c12 = arith.constant 12 : index
    %c0_16 = arith.constant 0 : index
    %38 = vector.load %arg3[%c12, %c0_16] : memref<22x128xf32, #tpu.memory_space<vmem>>, vector<1x32xf32>
    %c13 = arith.constant 13 : index
    %c0_17 = arith.constant 0 : index
    %39 = vector.load %arg3[%c13, %c0_17] : memref<22x128xf32, #tpu.memory_space<vmem>>, vector<1x32xf32>
    %c14 = arith.constant 14 : index
    %c0_18 = arith.constant 0 : index
    %40 = vector.load %arg3[%c14, %c0_18] : memref<22x128xf32, #tpu.memory_space<vmem>>, vector<1x32xf32>
    %c15 = arith.constant 15 : index
    %c0_19 = arith.constant 0 : index
    %41 = vector.load %arg3[%c15, %c0_19] : memref<22x128xf32, #tpu.memory_space<vmem>>, vector<1x32xf32>
    %c16 = arith.constant 16 : index
    %c0_20 = arith.constant 0 : index
    %42 = vector.load %arg3[%c16, %c0_20] : memref<22x128xf32, #tpu.memory_space<vmem>>, vector<1x32xf32>
    %c17 = arith.constant 17 : index
    %c0_21 = arith.constant 0 : index
    %43 = vector.load %arg3[%c17, %c0_21] : memref<22x128xf32, #tpu.memory_space<vmem>>, vector<1x32xf32>
    %c18 = arith.constant 18 : index
    %c0_22 = arith.constant 0 : index
    %44 = vector.load %arg3[%c18, %c0_22] : memref<22x128xf32, #tpu.memory_space<vmem>>, vector<1x64xf32>
    %c19 = arith.constant 19 : index
    %c0_23 = arith.constant 0 : index
    %45 = vector.load %arg3[%c19, %c0_23] : memref<22x128xf32, #tpu.memory_space<vmem>>, vector<1x32xf32>
    %cst_24 = arith.constant dense<0.000000e+00> : vector<8xf32>
    %46 = vector.multi_reduction <add>, %35, %cst_24 [1] : vector<8x32xf32> to vector<8xf32>
    %47 = vector.shape_cast %46 : vector<8xf32> to vector<8x1xf32>
    %cst_25 = arith.constant 3.200000e+01 : f32
    %48 = vector.broadcast %cst_25 : f32 to vector<8x1xf32>
    %49 = arith.divf %47, %48 : vector<8x1xf32>
    %50 = vector.broadcast %49 : vector<8x1xf32> to vector<8x32xf32>
    %51 = arith.subf %35, %50 : vector<8x32xf32>
    %52 = arith.mulf %51, %51 : vector<8x32xf32>
    %cst_26 = arith.constant dense<0.000000e+00> : vector<8xf32>
    %53 = vector.multi_reduction <add>, %52, %cst_26 [1] : vector<8x32xf32> to vector<8xf32>
    %54 = vector.shape_cast %53 : vector<8xf32> to vector<8x1xf32>
    %cst_27 = arith.constant 3.200000e+01 : f32
    %55 = vector.broadcast %cst_27 : f32 to vector<8x1xf32>
    %56 = arith.divf %54, %55 : vector<8x1xf32>
    %57 = vector.broadcast %49 : vector<8x1xf32> to vector<8x32xf32>
    %58 = arith.subf %35, %57 : vector<8x32xf32>
    %cst_28 = arith.constant 9.99999974E-6 : f32
    %59 = vector.broadcast %cst_28 : f32 to vector<8x1xf32>
    %60 = arith.addf %56, %59 : vector<8x1xf32>
    %61 = math.rsqrt %60 : vector<8x1xf32>
    %62 = vector.broadcast %61 : vector<8x1xf32> to vector<8x32xf32>
    %63 = arith.mulf %58, %62 : vector<8x32xf32>
    %64 = vector.broadcast %36 : vector<1x32xf32> to vector<8x32xf32>
    %65 = arith.mulf %63, %64 : vector<8x32xf32>
    %66 = vector.broadcast %37 : vector<1x32xf32> to vector<8x32xf32>
    %67 = arith.addf %65, %66 : vector<8x32xf32>
    %68 = arith.truncf %67 : vector<8x32xf32> to vector<8x32xbf16>
    %c0_29 = arith.constant 0 : index
    %c0_30 = arith.constant 0 : index
    %69 = vector.load %arg2[%c0_29, %c0_30] : memref<32x384xbf16, #tpu.memory_space<vmem>>, vector<32x384xbf16>
    %cst_31 = arith.constant dense<0.000000e+00> : vector<8x384xf32>
    %70 = tpu.matmul %68, %69, %cst_31 {dimension_numbers = #tpu.dot_dimension_numbers<[1], [0], [0], [1], [0, 0, 1, 1], [], []>} : vector<8x32xbf16>, vector<32x384xbf16>, vector<8x384xf32> -> vector<8x384xf32>
    %71 = vector.extract_strided_slice %70 {offsets = [0, 0], sizes = [8, 32], strides = [1, 1]} : vector<8x384xf32> to vector<8x32xf32>
    %72 = vector.broadcast %38 : vector<1x32xf32> to vector<8x32xf32>
    %73 = arith.addf %71, %72 : vector<8x32xf32>
    %74 = vector.extract_strided_slice %70 {offsets = [0, 128], sizes = [8, 32], strides = [1, 1]} : vector<8x384xf32> to vector<8x32xf32>
    %75 = vector.broadcast %39 : vector<1x32xf32> to vector<8x32xf32>
    %76 = arith.addf %74, %75 : vector<8x32xf32>
    %77 = vector.extract_strided_slice %70 {offsets = [0, 256], sizes = [8, 32], strides = [1, 1]} : vector<8x384xf32> to vector<8x32xf32>
    %78 = vector.broadcast %40 : vector<1x32xf32> to vector<8x32xf32>
    %79 = arith.addf %77, %78 : vector<8x32xf32>
    %80 = vector.broadcast %41 : vector<1x32xf32> to vector<8x32xf32>
    %81 = arith.addf %35, %80 : vector<8x32xf32>
    %82 = vector.extract_strided_slice %73 {offsets = [0, 0], sizes = [8, 8], strides = [1, 1]} : vector<8x32xf32> to vector<8x8xf32>
    %83 = arith.truncf %82 : vector<8x8xf32> to vector<8x8xbf16>
    %84 = vector.extract_strided_slice %76 {offsets = [0, 0], sizes = [8, 8], strides = [1, 1]} : vector<8x32xf32> to vector<8x8xf32>
    %85 = arith.truncf %84 : vector<8x8xf32> to vector<8x8xbf16>
    %cst_32 = arith.constant dense<0.000000e+00> : vector<8x8xf32>
    %86 = tpu.matmul %83, %85, %cst_32 {dimension_numbers = #tpu.dot_dimension_numbers<[1], [1], [0], [0], [0, 0, 1, 0], [], []>} : vector<8x8xbf16>, vector<8x8xbf16>, vector<8x8xf32> -> vector<8x8xf32>
    %87 = vector.broadcast %5 : vector<1x8xf32> to vector<8x8xf32>
    %88 = arith.addf %86, %87 : vector<8x8xf32>
    %cst_33 = arith.constant dense<0xFF800000> : vector<8xf32>
    %89 = vector.multi_reduction <maximumf>, %88, %cst_33 [1] : vector<8x8xf32> to vector<8xf32>
    %90 = vector.shape_cast %89 : vector<8xf32> to vector<8x1xf32>
    %91 = vector.broadcast %90 : vector<8x1xf32> to vector<8x8xf32>
    %92 = arith.subf %88, %91 : vector<8x8xf32>
    %93 = math.exp %92 : vector<8x8xf32>
    %cst_34 = arith.constant dense<0.000000e+00> : vector<8xf32>
    %94 = vector.multi_reduction <add>, %93, %cst_34 [1] : vector<8x8xf32> to vector<8xf32>
    %95 = vector.shape_cast %94 : vector<8xf32> to vector<8x1xf32>
    %96 = tpu.reciprocal %95 {approx = true} : vector<8x1xf32> -> vector<8x1xf32>
    %97 = vector.broadcast %96 : vector<8x1xf32> to vector<8x8xf32>
    %98 = arith.mulf %93, %97 : vector<8x8xf32>
    %99 = arith.truncf %98 : vector<8x8xf32> to vector<8x8xbf16>
    %100 = vector.extract_strided_slice %79 {offsets = [0, 0], sizes = [8, 8], strides = [1, 1]} : vector<8x32xf32> to vector<8x8xf32>
    %101 = arith.truncf %100 : vector<8x8xf32> to vector<8x8xbf16>
    %cst_35 = arith.constant dense<0.000000e+00> : vector<8x8xf32>
    %102 = tpu.matmul %99, %101, %cst_35 {dimension_numbers = #tpu.dot_dimension_numbers<[1], [0], [0], [1], [0, 0, 1, 1], [], []>} : vector<8x8xbf16>, vector<8x8xbf16>, vector<8x8xf32> -> vector<8x8xf32>
    %c192 = arith.constant 192 : index
    %c0_36 = arith.constant 0 : index
    %103 = vector.load %arg1[%c192, %c0_36] : memref<416x128xbf16, #tpu.memory_space<vmem>>, vector<8x32xbf16>
    %104 = arith.truncf %102 : vector<8x8xf32> to vector<8x8xbf16>
    %cst_37 = arith.constant dense<0.000000e+00> : vector<8x32xf32>
    %105 = tpu.matmul %104, %103, %cst_37 {dimension_numbers = #tpu.dot_dimension_numbers<[1], [0], [0], [1], [0, 0, 1, 1], [], []>} : vector<8x8xbf16>, vector<8x32xbf16>, vector<8x32xf32> -> vector<8x32xf32>
    %106 = arith.addf %81, %105 : vector<8x32xf32>
    %107 = vector.extract_strided_slice %73 {offsets = [0, 8], sizes = [8, 8], strides = [1, 1]} : vector<8x32xf32> to vector<8x8xf32>
    %108 = arith.truncf %107 : vector<8x8xf32> to vector<8x8xbf16>
    %109 = vector.extract_strided_slice %76 {offsets = [0, 8], sizes = [8, 8], strides = [1, 1]} : vector<8x32xf32> to vector<8x8xf32>
    %110 = arith.truncf %109 : vector<8x8xf32> to vector<8x8xbf16>
    %cst_38 = arith.constant dense<0.000000e+00> : vector<8x8xf32>
    %111 = tpu.matmul %108, %110, %cst_38 {dimension_numbers = #tpu.dot_dimension_numbers<[1], [1], [0], [0], [0, 0, 1, 0], [], []>} : vector<8x8xbf16>, vector<8x8xbf16>, vector<8x8xf32> -> vector<8x8xf32>
    %112 = vector.broadcast %5 : vector<1x8xf32> to vector<8x8xf32>
    %113 = arith.addf %111, %112 : vector<8x8xf32>
    %cst_39 = arith.constant dense<0xFF800000> : vector<8xf32>
    %114 = vector.multi_reduction <maximumf>, %113, %cst_39 [1] : vector<8x8xf32> to vector<8xf32>
    %115 = vector.shape_cast %114 : vector<8xf32> to vector<8x1xf32>
    %116 = vector.broadcast %115 : vector<8x1xf32> to vector<8x8xf32>
    %117 = arith.subf %113, %116 : vector<8x8xf32>
    %118 = math.exp %117 : vector<8x8xf32>
    %cst_40 = arith.constant dense<0.000000e+00> : vector<8xf32>
    %119 = vector.multi_reduction <add>, %118, %cst_40 [1] : vector<8x8xf32> to vector<8xf32>
    %120 = vector.shape_cast %119 : vector<8xf32> to vector<8x1xf32>
    %121 = tpu.reciprocal %120 {approx = true} : vector<8x1xf32> -> vector<8x1xf32>
    %122 = vector.broadcast %121 : vector<8x1xf32> to vector<8x8xf32>
    %123 = arith.mulf %118, %122 : vector<8x8xf32>
    %124 = arith.truncf %123 : vector<8x8xf32> to vector<8x8xbf16>
    %125 = vector.extract_strided_slice %79 {offsets = [0, 8], sizes = [8, 8], strides = [1, 1]} : vector<8x32xf32> to vector<8x8xf32>
    %126 = arith.truncf %125 : vector<8x8xf32> to vector<8x8xbf16>
    %cst_41 = arith.constant dense<0.000000e+00> : vector<8x8xf32>
    %127 = tpu.matmul %124, %126, %cst_41 {dimension_numbers = #tpu.dot_dimension_numbers<[1], [0], [0], [1], [0, 0, 1, 1], [], []>} : vector<8x8xbf16>, vector<8x8xbf16>, vector<8x8xf32> -> vector<8x8xf32>
    %c200 = arith.constant 200 : index
    %c0_42 = arith.constant 0 : index
    %128 = vector.load %arg1[%c200, %c0_42] : memref<416x128xbf16, #tpu.memory_space<vmem>>, vector<8x32xbf16>
    %129 = arith.truncf %127 : vector<8x8xf32> to vector<8x8xbf16>
    %cst_43 = arith.constant dense<0.000000e+00> : vector<8x32xf32>
    %130 = tpu.matmul %129, %128, %cst_43 {dimension_numbers = #tpu.dot_dimension_numbers<[1], [0], [0], [1], [0, 0, 1, 1], [], []>} : vector<8x8xbf16>, vector<8x32xbf16>, vector<8x32xf32> -> vector<8x32xf32>
    %131 = arith.addf %106, %130 : vector<8x32xf32>
    %132 = vector.extract_strided_slice %73 {offsets = [0, 16], sizes = [8, 8], strides = [1, 1]} : vector<8x32xf32> to vector<8x8xf32>
    %133 = arith.truncf %132 : vector<8x8xf32> to vector<8x8xbf16>
    %134 = vector.extract_strided_slice %76 {offsets = [0, 16], sizes = [8, 8], strides = [1, 1]} : vector<8x32xf32> to vector<8x8xf32>
    %135 = arith.truncf %134 : vector<8x8xf32> to vector<8x8xbf16>
    %cst_44 = arith.constant dense<0.000000e+00> : vector<8x8xf32>
    %136 = tpu.matmul %133, %135, %cst_44 {dimension_numbers = #tpu.dot_dimension_numbers<[1], [1], [0], [0], [0, 0, 1, 0], [], []>} : vector<8x8xbf16>, vector<8x8xbf16>, vector<8x8xf32> -> vector<8x8xf32>
    %137 = vector.broadcast %5 : vector<1x8xf32> to vector<8x8xf32>
    %138 = arith.addf %136, %137 : vector<8x8xf32>
    %cst_45 = arith.constant dense<0xFF800000> : vector<8xf32>
    %139 = vector.multi_reduction <maximumf>, %138, %cst_45 [1] : vector<8x8xf32> to vector<8xf32>
    %140 = vector.shape_cast %139 : vector<8xf32> to vector<8x1xf32>
    %141 = vector.broadcast %140 : vector<8x1xf32> to vector<8x8xf32>
    %142 = arith.subf %138, %141 : vector<8x8xf32>
    %143 = math.exp %142 : vector<8x8xf32>
    %cst_46 = arith.constant dense<0.000000e+00> : vector<8xf32>
    %144 = vector.multi_reduction <add>, %143, %cst_46 [1] : vector<8x8xf32> to vector<8xf32>
    %145 = vector.shape_cast %144 : vector<8xf32> to vector<8x1xf32>
    %146 = tpu.reciprocal %145 {approx = true} : vector<8x1xf32> -> vector<8x1xf32>
    %147 = vector.broadcast %146 : vector<8x1xf32> to vector<8x8xf32>
    %148 = arith.mulf %143, %147 : vector<8x8xf32>
    %149 = arith.truncf %148 : vector<8x8xf32> to vector<8x8xbf16>
    %150 = vector.extract_strided_slice %79 {offsets = [0, 16], sizes = [8, 8], strides = [1, 1]} : vector<8x32xf32> to vector<8x8xf32>
    %151 = arith.truncf %150 : vector<8x8xf32> to vector<8x8xbf16>
    %cst_47 = arith.constant dense<0.000000e+00> : vector<8x8xf32>
    %152 = tpu.matmul %149, %151, %cst_47 {dimension_numbers = #tpu.dot_dimension_numbers<[1], [0], [0], [1], [0, 0, 1, 1], [], []>} : vector<8x8xbf16>, vector<8x8xbf16>, vector<8x8xf32> -> vector<8x8xf32>
    %c208 = arith.constant 208 : index
    %c0_48 = arith.constant 0 : index
    %153 = vector.load %arg1[%c208, %c0_48] : memref<416x128xbf16, #tpu.memory_space<vmem>>, vector<8x32xbf16>
    %154 = arith.truncf %152 : vector<8x8xf32> to vector<8x8xbf16>
    %cst_49 = arith.constant dense<0.000000e+00> : vector<8x32xf32>
    %155 = tpu.matmul %154, %153, %cst_49 {dimension_numbers = #tpu.dot_dimension_numbers<[1], [0], [0], [1], [0, 0, 1, 1], [], []>} : vector<8x8xbf16>, vector<8x32xbf16>, vector<8x32xf32> -> vector<8x32xf32>
    %156 = arith.addf %131, %155 : vector<8x32xf32>
    %157 = vector.extract_strided_slice %73 {offsets = [0, 24], sizes = [8, 8], strides = [1, 1]} : vector<8x32xf32> to vector<8x8xf32>
    %158 = arith.truncf %157 : vector<8x8xf32> to vector<8x8xbf16>
    %159 = vector.extract_strided_slice %76 {offsets = [0, 24], sizes = [8, 8], strides = [1, 1]} : vector<8x32xf32> to vector<8x8xf32>
    %160 = arith.truncf %159 : vector<8x8xf32> to vector<8x8xbf16>
    %cst_50 = arith.constant dense<0.000000e+00> : vector<8x8xf32>
    %161 = tpu.matmul %158, %160, %cst_50 {dimension_numbers = #tpu.dot_dimension_numbers<[1], [1], [0], [0], [0, 0, 1, 0], [], []>} : vector<8x8xbf16>, vector<8x8xbf16>, vector<8x8xf32> -> vector<8x8xf32>
    %162 = vector.broadcast %5 : vector<1x8xf32> to vector<8x8xf32>
    %163 = arith.addf %161, %162 : vector<8x8xf32>
    %cst_51 = arith.constant dense<0xFF800000> : vector<8xf32>
    %164 = vector.multi_reduction <maximumf>, %163, %cst_51 [1] : vector<8x8xf32> to vector<8xf32>
    %165 = vector.shape_cast %164 : vector<8xf32> to vector<8x1xf32>
    %166 = vector.broadcast %165 : vector<8x1xf32> to vector<8x8xf32>
    %167 = arith.subf %163, %166 : vector<8x8xf32>
    %168 = math.exp %167 : vector<8x8xf32>
    %cst_52 = arith.constant dense<0.000000e+00> : vector<8xf32>
    %169 = vector.multi_reduction <add>, %168, %cst_52 [1] : vector<8x8xf32> to vector<8xf32>
    %170 = vector.shape_cast %169 : vector<8xf32> to vector<8x1xf32>
    %171 = tpu.reciprocal %170 {approx = true} : vector<8x1xf32> -> vector<8x1xf32>
    %172 = vector.broadcast %171 : vector<8x1xf32> to vector<8x8xf32>
    %173 = arith.mulf %168, %172 : vector<8x8xf32>
    %174 = arith.truncf %173 : vector<8x8xf32> to vector<8x8xbf16>
    %175 = vector.extract_strided_slice %79 {offsets = [0, 24], sizes = [8, 8], strides = [1, 1]} : vector<8x32xf32> to vector<8x8xf32>
    %176 = arith.truncf %175 : vector<8x8xf32> to vector<8x8xbf16>
    %cst_53 = arith.constant dense<0.000000e+00> : vector<8x8xf32>
    %177 = tpu.matmul %174, %176, %cst_53 {dimension_numbers = #tpu.dot_dimension_numbers<[1], [0], [0], [1], [0, 0, 1, 1], [], []>} : vector<8x8xbf16>, vector<8x8xbf16>, vector<8x8xf32> -> vector<8x8xf32>
    %c216 = arith.constant 216 : index
    %c0_54 = arith.constant 0 : index
    %178 = vector.load %arg1[%c216, %c0_54] : memref<416x128xbf16, #tpu.memory_space<vmem>>, vector<8x32xbf16>
    %179 = arith.truncf %177 : vector<8x8xf32> to vector<8x8xbf16>
    %cst_55 = arith.constant dense<0.000000e+00> : vector<8x32xf32>
    %180 = tpu.matmul %179, %178, %cst_55 {dimension_numbers = #tpu.dot_dimension_numbers<[1], [0], [0], [1], [0, 0, 1, 1], [], []>} : vector<8x8xbf16>, vector<8x32xbf16>, vector<8x32xf32> -> vector<8x32xf32>
    %181 = arith.addf %156, %180 : vector<8x32xf32>
    %cst_56 = arith.constant dense<0.000000e+00> : vector<8xf32>
    %182 = vector.multi_reduction <add>, %181, %cst_56 [1] : vector<8x32xf32> to vector<8xf32>
    %183 = vector.shape_cast %182 : vector<8xf32> to vector<8x1xf32>
    %cst_57 = arith.constant 3.200000e+01 : f32
    %184 = vector.broadcast %cst_57 : f32 to vector<8x1xf32>
    %185 = arith.divf %183, %184 : vector<8x1xf32>
    %186 = vector.broadcast %185 : vector<8x1xf32> to vector<8x32xf32>
    %187 = arith.subf %181, %186 : vector<8x32xf32>
    %188 = arith.mulf %187, %187 : vector<8x32xf32>
    %cst_58 = arith.constant dense<0.000000e+00> : vector<8xf32>
    %189 = vector.multi_reduction <add>, %188, %cst_58 [1] : vector<8x32xf32> to vector<8xf32>
    %190 = vector.shape_cast %189 : vector<8xf32> to vector<8x1xf32>
    %cst_59 = arith.constant 3.200000e+01 : f32
    %191 = vector.broadcast %cst_59 : f32 to vector<8x1xf32>
    %192 = arith.divf %190, %191 : vector<8x1xf32>
    %193 = vector.broadcast %185 : vector<8x1xf32> to vector<8x32xf32>
    %194 = arith.subf %181, %193 : vector<8x32xf32>
    %cst_60 = arith.constant 9.99999974E-6 : f32
    %195 = vector.broadcast %cst_60 : f32 to vector<8x1xf32>
    %196 = arith.addf %192, %195 : vector<8x1xf32>
    %197 = math.rsqrt %196 : vector<8x1xf32>
    %198 = vector.broadcast %197 : vector<8x1xf32> to vector<8x32xf32>
    %199 = arith.mulf %194, %198 : vector<8x32xf32>
    %200 = vector.broadcast %42 : vector<1x32xf32> to vector<8x32xf32>
    %201 = arith.mulf %199, %200 : vector<8x32xf32>
    %202 = vector.broadcast %43 : vector<1x32xf32> to vector<8x32xf32>
    %203 = arith.addf %201, %202 : vector<8x32xf32>
    %c224 = arith.constant 224 : index
    %c0_61 = arith.constant 0 : index
    %204 = vector.load %arg1[%c224, %c0_61] : memref<416x128xbf16, #tpu.memory_space<vmem>>, vector<32x64xbf16>
    %205 = arith.truncf %203 : vector<8x32xf32> to vector<8x32xbf16>
    %cst_62 = arith.constant dense<0.000000e+00> : vector<8x64xf32>
    %206 = tpu.matmul %205, %204, %cst_62 {dimension_numbers = #tpu.dot_dimension_numbers<[1], [0], [0], [1], [0, 0, 1, 1], [], []>} : vector<8x32xbf16>, vector<32x64xbf16>, vector<8x64xf32> -> vector<8x64xf32>
    %207 = vector.broadcast %44 : vector<1x64xf32> to vector<8x64xf32>
    %208 = arith.addf %206, %207 : vector<8x64xf32>
    %cst_63 = arith.constant 1.702000e+00 : f32
    %209 = vector.broadcast %cst_63 : f32 to vector<8x64xf32>
    %210 = arith.mulf %209, %208 : vector<8x64xf32>
    %211 = arith.negf %210 : vector<8x64xf32>
    %212 = math.exp %211 : vector<8x64xf32>
    %cst_64 = arith.constant 1.000000e+00 : f32
    %213 = vector.broadcast %cst_64 : f32 to vector<8x64xf32>
    %214 = arith.addf %213, %212 : vector<8x64xf32>
    %215 = arith.divf %213, %214 : vector<8x64xf32>
    %216 = arith.mulf %208, %215 : vector<8x64xf32>
    %c256 = arith.constant 256 : index
    %c0_65 = arith.constant 0 : index
    %217 = vector.load %arg1[%c256, %c0_65] : memref<416x128xbf16, #tpu.memory_space<vmem>>, vector<64x32xbf16>
    %218 = arith.truncf %216 : vector<8x64xf32> to vector<8x64xbf16>
    %cst_66 = arith.constant dense<0.000000e+00> : vector<8x32xf32>
    %219 = tpu.matmul %218, %217, %cst_66 {dimension_numbers = #tpu.dot_dimension_numbers<[1], [0], [0], [1], [0, 0, 1, 1], [], []>} : vector<8x64xbf16>, vector<64x32xbf16>, vector<8x32xf32> -> vector<8x32xf32>
    %220 = arith.addf %181, %219 : vector<8x32xf32>
    %221 = vector.broadcast %45 : vector<1x32xf32> to vector<8x32xf32>
    %222 = arith.addf %220, %221 : vector<8x32xf32>
    %c320 = arith.constant 320 : index
    %c0_67 = arith.constant 0 : index
    %223 = vector.load %arg1[%c320, %c0_67] : memref<416x128xbf16, #tpu.memory_space<vmem>>, vector<32x64xbf16>
    %c352 = arith.constant 352 : index
    %c0_68 = arith.constant 0 : index
    %224 = vector.load %arg1[%c352, %c0_68] : memref<416x128xbf16, #tpu.memory_space<vmem>>, vector<64x128xbf16>
    %c20 = arith.constant 20 : index
    %c0_69 = arith.constant 0 : index
    %225 = vector.load %arg3[%c20, %c0_69] : memref<22x128xf32, #tpu.memory_space<vmem>>, vector<1x64xf32>
    %c21 = arith.constant 21 : index
    %c0_70 = arith.constant 0 : index
    %226 = vector.load %arg3[%c21, %c0_70] : memref<22x128xf32, #tpu.memory_space<vmem>>, vector<1x128xf32>
    %227 = arith.truncf %222 : vector<8x32xf32> to vector<8x32xbf16>
    %cst_71 = arith.constant dense<0.000000e+00> : vector<8x64xf32>
    %228 = tpu.matmul %227, %223, %cst_71 {dimension_numbers = #tpu.dot_dimension_numbers<[1], [0], [0], [1], [0, 0, 1, 1], [], []>} : vector<8x32xbf16>, vector<32x64xbf16>, vector<8x64xf32> -> vector<8x64xf32>
    %229 = vector.broadcast %225 : vector<1x64xf32> to vector<8x64xf32>
    %230 = arith.addf %228, %229 : vector<8x64xf32>
    %231 = arith.mulf %230, %230 : vector<8x64xf32>
    %232 = arith.mulf %230, %231 : vector<8x64xf32>
    %cst_72 = arith.constant 4.471500e-02 : f32
    %233 = vector.broadcast %cst_72 : f32 to vector<8x64xf32>
    %234 = arith.mulf %233, %232 : vector<8x64xf32>
    %235 = arith.addf %230, %234 : vector<8x64xf32>
    %cst_73 = arith.constant 0.797884583 : f32
    %236 = vector.broadcast %cst_73 : f32 to vector<8x64xf32>
    %237 = arith.mulf %236, %235 : vector<8x64xf32>
    %238 = math.tanh %237 : vector<8x64xf32>
    %cst_74 = arith.constant 1.000000e+00 : f32
    %239 = vector.broadcast %cst_74 : f32 to vector<8x64xf32>
    %240 = arith.addf %239, %238 : vector<8x64xf32>
    %cst_75 = arith.constant 5.000000e-01 : f32
    %241 = vector.broadcast %cst_75 : f32 to vector<8x64xf32>
    %242 = arith.mulf %241, %240 : vector<8x64xf32>
    %243 = arith.mulf %230, %242 : vector<8x64xf32>
    %244 = arith.truncf %243 : vector<8x64xf32> to vector<8x64xbf16>
    %cst_76 = arith.constant dense<0.000000e+00> : vector<8x128xf32>
    %245 = tpu.matmul %244, %224, %cst_76 {dimension_numbers = #tpu.dot_dimension_numbers<[1], [0], [0], [1], [0, 0, 1, 1], [], []>} : vector<8x64xbf16>, vector<64x128xbf16>, vector<8x128xf32> -> vector<8x128xf32>
    %246 = vector.broadcast %226 : vector<1x128xf32> to vector<8x128xf32>
    %247 = arith.addf %245, %246 : vector<8x128xf32>
    %c0_77 = arith.constant 0 : index
    %c0_78 = arith.constant 0 : index
    %248 = vector.load %arg4[%c0_77, %c0_78] : memref<8x128xf32, #tpu.memory_space<vmem>>, vector<8x128xf32>
    tpu.vector_store %arg4[%c0_77, %c0_78], %247 {strides = array<i32>} : memref<8x128xf32, #tpu.memory_space<vmem>>, vector<8x128xf32>,
    return
  }
}

</mosaic_0001>

<llo_original>
// kernel: llava_forward.1
$region0: #{llava_forward.1}
  #allocation0 [shape = 'u32[]', space=smem, size = 0x4, offset = 0x4, fixed_abs, tag = 'smem constant byte address 0x4 - core index']
  #allocation1 [shape = 'u32[144,128]{1,0:T(1,128)}', space=vmem, size = 0x12000, scoped, tag = 'internal scratch']
  %s0 = inlined_call_operand.vmem [shape: f32[8,192], index: 0, kind: input, shape index: {}]
  %s1 = inlined_call_operand.vmem [shape: bf16[416,128], index: 1, kind: input, shape index: {}]
  %s2 = inlined_call_operand.vmem [shape: bf16[32,384], index: 2, kind: input, shape index: {}]
  %s3 = inlined_call_operand.vmem [shape: f32[22,128], index: 3, kind: input, shape index: {}]
  %s4 = inlined_call_operand.vmem [shape: f32[8,128], index: 4, kind: output, shape index: {}]
  %s5 = sld [smem:[#allocation0]]
  $region26: #{llava_forward.1} parent=0
    _
  %s7 = ssub.s32 1, %s5
  %s8 = scalar_select 0, %s7, %s5
  // Predicated region
  $region2: #{llava_forward.1} parent=0 // pred_check
    _
  $region3: #{llava_forward.1} parent=0 // pred_check_branch
    %10 = sbr.rel (0) target = $region5
  $region4: #{llava_forward.1} parent=0 // pred_region
    _
  $region5: #{llava_forward.1} parent=0 // pred_fallthru
    _
  // Predicated region
  $region6: #{llava_forward.1} parent=0 // pred_check
    _
  $region7: #{llava_forward.1} parent=0 // pred_check_branch
    %12 = sbr.rel (0) target = $region9
  $region8: #{llava_forward.1} parent=0 // pred_region
    _
  $region9: #{llava_forward.1} parent=0 // pred_fallthru
    _
  // Predicated region
  $region10: #{llava_forward.1} parent=0 // pred_check
    _
  $region11: #{llava_forward.1} parent=0 // pred_check_branch
    %14 = sbr.rel (0) target = $region13
  $region12: #{llava_forward.1} parent=0 // pred_region
    _
  $region13: #{llava_forward.1} parent=0 // pred_fallthru
    _
  // Predicated region
  $region14: #{llava_forward.1} parent=0 // pred_check
    _
  $region15: #{llava_forward.1} parent=0 // pred_check_branch
    %16 = sbr.rel (0) target = $region17
  $region16: #{llava_forward.1} parent=0 // pred_region
    _
  $region17: #{llava_forward.1} parent=0 // pred_fallthru
    _
  %v18 = vlaneseq
  %v19 = vand.u32 %v18, 127
  %vm20 = vcmp.lt.s32.totalorder %v19, 5
  %v21 = vsel %vm20, 0.0, -1e+30
  %v22 = vld [vmem:[%s3] sm:$0xff]
  %v23 = vld [vmem:[%s3 + $0x8] sm:$0x1]
  %v24 = vld [vmem:[%s3 + $0x9] sm:$0x1]
  %v25 = vld [vmem:[%s1] sm:$0xf]
  %v26 = vld [vmem:[%s1 + $0x4] sm:$0xf]
  %v27 = vld [vmem:[%s1 + $0x8] sm:$0xf]
  %v28 = vld [vmem:[%s1 + $0xc] sm:$0xf]
  %v29 = vld [vmem:[%s1 + $0x10] sm:$0xf]
  %v30 = vld [vmem:[%s1 + $0x14] sm:$0xf]
  %v31 = vld [vmem:[%s1 + $0x18] sm:$0xf]
  %v32 = vld [vmem:[%s1 + $0x1c] sm:$0xf]
  %v33 = vld [vmem:[%s1 + $0x20] sm:$0xf]
  %v34 = vld [vmem:[%s1 + $0x24] sm:$0xf]
  %v35 = vld [vmem:[%s1 + $0x28] sm:$0xf]
  %v36 = vld [vmem:[%s1 + $0x2c] sm:$0xf]
  %v37 = vld [vmem:[%s1 + $0x30] sm:$0xf]
  %v38 = vld [vmem:[%s1 + $0x34] sm:$0xf]
  %v39 = vld [vmem:[%s1 + $0x38] sm:$0xf]
  %v40 = vld [vmem:[%s1 + $0x3c] sm:$0xf]
  %v41 = vld [vmem:[%s1 + $0x40] sm:$0xf]
  %v42 = vld [vmem:[%s1 + $0x44] sm:$0xf]
  %v43 = vld [vmem:[%s1 + $0x48] sm:$0xf]
  %v44 = vld [vmem:[%s1 + $0x4c] sm:$0xf]
  %v45 = vld [vmem:[%s1 + $0x50] sm:$0xf]
  %v46 = vld [vmem:[%s1 + $0x54] sm:$0xf]
  %v47 = vld [vmem:[%s1 + $0x58] sm:$0xf]
  %v48 = vld [vmem:[%s1 + $0x5c] sm:$0xf]
  %v49 = vld [vmem:[%s0] sm:$0xff]
  %v50 = vld [vmem:[%s0 + $0x8] sm:$0xff]
  %v51 = vpack.c.bf16 %v49, %v49
  %v52 = vpack.c.bf16 %v50, %v50
  %v77 = vunpack.c.l.b16 %v25
  %v78 = vunpack.c.l.b16 %v26
  %v79 = vunpack.c.l.b16 %v27
  %v80 = vunpack.c.l.b16 %v28
  %v81 = vunpack.c.l.b16 %v29
  %v82 = vunpack.c.l.b16 %v30
  %v83 = vunpack.c.l.b16 %v31
  %v84 = vunpack.c.l.b16 %v32
  %v85 = vunpack.c.l.b16 %v33
  %v86 = vunpack.c.l.b16 %v34
  %v87 = vunpack.c.l.b16 %v35
  %v88 = vunpack.c.l.b16 %v36
  %v89 = vunpack.c.l.b16 %v37
  %v90 = vunpack.c.l.b16 %v38
  %v91 = vunpack.c.l.b16 %v39
  %v92 = vunpack.c.l.b16 %v40
  %v93 = vunpack.c.l.b16 %v41
  %v94 = vunpack.c.l.b16 %v42
  %v95 = vunpack.c.l.b16 %v43
  %v96 = vunpack.c.l.b16 %v44
  %v97 = vunpack.c.l.b16 %v45
  %v98 = vunpack.c.l.b16 %v46
  %v99 = vunpack.c.l.b16 %v47
  %v100 = vunpack.c.l.b16 %v48
  %v101 = vpack.c.b16 %v78, %v77
  %v102 = vpack.c.b16 %v80, %v79
  %v103 = vpack.c.b16 %v82, %v81
  %v104 = vpack.c.b16 %v84, %v83
  %v105 = vpack.c.b16 %v86, %v85
  %v106 = vpack.c.b16 %v88, %v87
  %v107 = vpack.c.b16 %v90, %v89
  %v108 = vpack.c.b16 %v92, %v91
  %v109 = vpack.c.b16 %v94, %v93
  %v110 = vpack.c.b16 %v96, %v95
  %v111 = vpack.c.b16 %v98, %v97
  %v112 = vpack.c.b16 %v100, %v99
  %vm125 = vcmask 523264
  %v127 = vsel %vm125, %v52, 0
  %129 = vmatprep.subr.bf16.mxu0 0
  %130 = vmatpush1.bf16.msra.mxu0 %v101
  %131 = vmatprep.subr.bf16.mxu0 0
  %132 = vmatpush1.bf16.msra.mxu0 %v102
  %133 = vmatprep.subr.bf16.mxu0 0
  %134 = vmatpush1.bf16.msra.mxu0 %v103
  %135 = vmatprep.subr.bf16.mxu0 0
  %136 = vmatpush1.bf16.msra.mxu0 %v104
  %137 = vmatprep.subr.bf16.mxu0 0
  %138 = vmatpush1.bf16.msra.mxu0 %v105
  %139 = vmatprep.subr.bf16.mxu0 0
  %140 = vmatpush1.bf16.msra.mxu0 %v106
  %141 = vmatprep.subr.bf16.mxu0 0
  %142 = vmatpush1.bf16.msra.mxu0 %v107
  %143 = vmatprep.subr.bf16.mxu0 0
  %144 = vmatpush1.bf16.msra.mxu0 %v108
  %145 = vmatprep.subr.bf16.mxu0 0
  %146 = vmatpush1.bf16.msra.mxu0 %v109
  %147 = vmatprep.subr.bf16.mxu0 0
  %148 = vmatpush1.bf16.msra.mxu0 %v110
  %149 = vmatprep.subr.bf16.mxu0 0
  %150 = vmatpush1.bf16.msra.mxu0 %v111
  %151 = vmatprep.subr.bf16.mxu0 0
  %152 = vmatpush1.bf16.msra.mxu0 %v112
  %153 = vmatprep.subr.bf16.mxu0 0
  %154 = vmatpush1.bf16.msra.mxu0 0
  %155 = vmatprep.subr.bf16.mxu0 0
  %156 = vmatpush1.bf16.msra.mxu0 0
  %157 = vmatprep.subr.bf16.mxu0 0
  %158 = vmatpush1.bf16.msra.mxu0 0
  %159 = vmatprep.subr.bf16.mxu0 0
  %160 = vmatpush1.bf16.msra.mxu0 0
  %161 = vmatprep.mubr.bf16.mxu0 %v127
  %162 = vmatmul.mubr.bf16.gmra.mrb[0].mxu0 %v51
  %v163 = vpop.f32.mrb[0].mxu0
  %v164 = vadd.f32 %v22, %v163
  %v165 = vpop.f32.mrb[0].mxu0
  %v166 = vpop.f32.mrb[0].mxu0
  %v167 = vpop.f32.mrb[0].mxu0
  %168 = vdwg.mxu0
  %vm169 = vcmask 261120
  %v170 = vsel %vm169, %v164, 0.0
  %171 = vadd.xlane.f32.xlu0 %v170
  %v172 = vpop.xlane.xlu0 %171
  %v173 = vrcp.pop 32.0
  %v174 = vmul.f32 %v172, %v173
  %v175 = vsub.f32 %v164, %v174
  %v176 = vmul.f32 %v175, %v175
  %v177 = vsel %vm169, %v176, 0.0
  %178 = vadd.xlane.f32.xlu0 %v177
  %v179 = vpop.xlane.xlu0 %178
  %v180 = vmul.f32 %v179, %v173
  %v181 = vadd.f32 %v180, 1e-05
  %v182 = vrsqrt.pop %v181
  %v183 = vmul.f32 %v175, %v182
  %v184 = vlaneseq
  %v185 = vshrl.u32 %v184, 7
  %v186 = vsub.s32 0, %v185
  %v187 = vrot.slane %v23, %v186
  %v188 = vmul.f32 %v183, %v187
  %v189 = vlaneseq
  %v190 = vshrl.u32 %v189, 7
  %v191 = vsub.s32 0, %v190
  %v192 = vrot.slane %v24, %v191
  %v193 = vadd.f32 %v188, %v192
  %v194 = vld [vmem:[%s3 + $0xa] sm:$0x1]
  %v195 = vld [vmem:[%s3 + $0xb] sm:$0x1]
  %v196 = vld [vmem:[%s3 + $0xc] sm:$0x1]
  %v197 = vld [vmem:[%s3 + $0xd] sm:$0x1]
  %v198 = vld [vmem:[%s3 + $0xe] sm:$0x1]
  %v199 = vld [vmem:[%s3 + $0xf] sm:$0x1]
  %v200 = vld [vmem:[%s3 + $0x10] sm:$0x1]
  %v201 = vld [vmem:[%s3 + $0x11] sm:$0x1]
  %v202 = vld [vmem:[%s3 + $0x12] sm:$0x1]
  %v203 = vld [vmem:[%s3 + $0x13] sm:$0x1]
  %v204 = vsel %vm169, %v193, 0.0
  %205 = vadd.xlane.f32.xlu0 %v204
  %v206 = vpop.xlane.xlu0 %205
  %v207 = vmul.f32 %v206, %v173
  %v208 = vsub.f32 %v193, %v207
  %v209 = vmul.f32 %v208, %v208
  %v210 = vsel %vm169, %v209, 0.0
  %211 = vadd.xlane.f32.xlu0 %v210
  %v212 = vpop.xlane.xlu0 %211
  %v213 = vmul.f32 %v212, %v173
  %v214 = vadd.f32 %v213, 1e-05
  %v215 = vrsqrt.pop %v214
  %v216 = vmul.f32 %v208, %v215
  %v217 = vlaneseq
  %v218 = vshrl.u32 %v217, 7
  %v219 = vsub.s32 0, %v218
  %v220 = vrot.slane %v194, %v219
  %v221 = vmul.f32 %v216, %v220
  %v222 = vlaneseq
  %v223 = vshrl.u32 %v222, 7
  %v224 = vsub.s32 0, %v223
  %v225 = vrot.slane %v195, %v224
  %v226 = vadd.f32 %v221, %v225
  %v227 = vpack.c.bf16 %v226, %v226
  %v228 = vld [vmem:[%s2] sm:$0xff]
  %v229 = vld [vmem:[%s2 + $0x8] sm:$0xf]
  %v230 = vld [vmem:[%s2 + $0xc] sm:$0xff]
  %v231 = vld [vmem:[%s2 + $0x14] sm:$0xf]
  %v232 = vld [vmem:[%s2 + $0x18] sm:$0xff]
  %v233 = vld [vmem:[%s2 + $0x20] sm:$0xf]
  %v234 = vld [vmem:[%s2 + $0x24] sm:$0xff]
  %v235 = vld [vmem:[%s2 + $0x2c] sm:$0xf]
  %v244 = vunpack.c.l.b16 %v228
  %v245 = vunpack.c.h.b16 %v228
  %v246 = vunpack.c.l.b16 %v229
  %v247 = vunpack.c.l.b16 %v230
  %v248 = vunpack.c.h.b16 %v230
  %v249 = vunpack.c.l.b16 %v231
  %v250 = vunpack.c.l.b16 %v232
  %v251 = vunpack.c.h.b16 %v232
  %v252 = vunpack.c.l.b16 %v233
  %v253 = vunpack.c.l.b16 %v234
  %v254 = vunpack.c.h.b16 %v234
  %v255 = vunpack.c.l.b16 %v235
  %v256 = vpack.c.b16 %v247, %v244
  %v257 = vpack.c.b16 %v248, %v245
  %v258 = vpack.c.b16 %v249, %v246
  %v259 = vpack.c.b16 %v253, %v250
  %v260 = vpack.c.b16 %v254, %v251
  %v261 = vpack.c.b16 %v255, %v252
  %v269 = vsel %vm169, %v227, 0
  %271 = vmatprep.subr.bf16.mxu0 %v257
  %272 = vmatpush1.bf16.msra.mxu0 %v256
  %273 = vmatprep.subr.bf16.mxu0 %v260
  %274 = vmatpush1.bf16.msra.mxu0 %v259
  %275 = vmatprep.subr.bf16.mxu0 0
  %276 = vmatpush1.bf16.msra.mxu0 0
  %277 = vmatprep.subr.bf16.mxu0 0
  %278 = vmatpush1.bf16.msra.mxu0 0
  %279 = vmatprep.subr.bf16.mxu0 0
  %280 = vmatpush1.bf16.msra.mxu0 0
  %281 = vmatprep.subr.bf16.mxu0 0
  %282 = vmatpush1.bf16.msra.mxu0 0
  %283 = vmatprep.subr.bf16.mxu0 0
  %284 = vmatpush1.bf16.msra.mxu0 0
  %285 = vmatprep.subr.bf16.mxu0 0
  %286 = vmatpush1.bf16.msra.mxu0 0
  %287 = vmatprep.subr.bf16.mxu0 0
  %288 = vmatpush1.bf16.msra.mxu0 0
  %289 = vmatprep.subr.bf16.mxu0 0
  %290 = vmatpush1.bf16.msra.mxu0 0
  %291 = vmatprep.subr.bf16.mxu0 0
  %292 = vmatpush1.bf16.msra.mxu0 0
  %293 = vmatprep.subr.bf16.mxu0 0
  %294 = vmatpush1.bf16.msra.mxu0 0
  %295 = vmatprep.subr.bf16.mxu0 0
  %296 = vmatpush1.bf16.msra.mxu0 0
  %297 = vmatprep.subr.bf16.mxu0 0
  %298 = vmatpush1.bf16.msra.mxu0 0
  %299 = vmatprep.subr.bf16.mxu0 0
  %300 = vmatpush1.bf16.msra.mxu0 0
  %301 = vmatprep.subr.bf16.mxu0 0
  %302 = vmatpush1.bf16.msra.mxu0 0
  %303 = vmatprep.mubr.bf16.mxu0 0
  %304 = vmatmul.mubr.bf16.gmra.mrb[0].mxu0 %v269
  %v305 = vpop.f32.mrb[0].mxu0
  %v306 = vadd.f32 0.0, %v305
  %v307 = vpop.f32.mrb[0].mxu0
  %v308 = vadd.f32 0.0, %v307
  %v309 = vpop.f32.mrb[0].mxu0
  %v310 = vpop.f32.mrb[0].mxu0
  %311 = vdwg.mxu0
  %312 = vmatprep.subr.bf16.mxu0 0
  %313 = vmatpush1.bf16.msra.mxu0 %v258
  %314 = vmatprep.subr.bf16.mxu0 0
  %315 = vmatpush1.bf16.msra.mxu0 %v261
  %316 = vmatprep.subr.bf16.mxu0 0
  %317 = vmatpush1.bf16.msra.mxu0 0
  %318 = vmatprep.subr.bf16.mxu0 0
  %319 = vmatpush1.bf16.msra.mxu0 0
  %320 = vmatprep.subr.bf16.mxu0 0
  %321 = vmatpush1.bf16.msra.mxu0 0
  %322 = vmatprep.subr.bf16.mxu0 0
  %323 = vmatpush1.bf16.msra.mxu0 0
  %324 = vmatprep.subr.bf16.mxu0 0
  %325 = vmatpush1.bf16.msra.mxu0 0
  %326 = vmatprep.subr.bf16.mxu0 0
  %327 = vmatpush1.bf16.msra.mxu0 0
  %328 = vmatprep.subr.bf16.mxu0 0
  %329 = vmatpush1.bf16.msra.mxu0 0
  %330 = vmatprep.subr.bf16.mxu0 0
  %331 = vmatpush1.bf16.msra.mxu0 0
  %332 = vmatprep.subr.bf16.mxu0 0
  %333 = vmatpush1.bf16.msra.mxu0 0
  %334 = vmatprep.subr.bf16.mxu0 0
  %335 = vmatpush1.bf16.msra.mxu0 0
  %336 = vmatprep.subr.bf16.mxu0 0
  %337 = vmatpush1.bf16.msra.mxu0 0
  %338 = vmatprep.subr.bf16.mxu0 0
  %339 = vmatpush1.bf16.msra.mxu0 0
  %340 = vmatprep.subr.bf16.mxu0 0
  %341 = vmatpush1.bf16.msra.mxu0 0
  %342 = vmatprep.subr.bf16.mxu0 0
  %343 = vmatpush1.bf16.msra.mxu0 0
  %344 = vmatprep.mubr.bf16.mxu0 0
  %345 = vmatmul.mubr.bf16.gmra.mrb[0].mxu0 %v269
  %v346 = vpop.f32.mrb[0].mxu0
  %v347 = vadd.f32 0.0, %v346
  %v348 = vpop.f32.mrb[0].mxu0
  %v349 = vpop.f32.mrb[0].mxu0
  %v350 = vpop.f32.mrb[0].mxu0
  %351 = vdwg.mxu0
  %v352 = vlaneseq
  %v353 = vshrl.u32 %v352, 7
  %v354 = vsub.s32 0, %v353
  %v355 = vrot.slane %v196, %v354
  %v356 = vadd.f32 %v306, %v355
  %v357 = vlaneseq
  %v358 = vshrl.u32 %v357, 7
  %v359 = vsub.s32 0, %v358
  %v360 = vrot.slane %v197, %v359
  %v361 = vadd.f32 %v308, %v360
  %v362 = vlaneseq
  %v363 = vshrl.u32 %v362, 7
  %v364 = vsub.s32 0, %v363
  %v365 = vrot.slane %v198, %v364
  %v366 = vadd.f32 %v347, %v365
  %v367 = vlaneseq
  %v368 = vshrl.u32 %v367, 7
  %v369 = vsub.s32 0, %v368
  %v370 = vrot.slane %v199, %v369
  %v371 = vadd.f32 %v193, %v370
  %v372 = vpack.c.bf16 %v356, %v356
  %v373 = vpack.c.bf16 %v361, %v361
  %vm374 = vcmask 64512
  %v376 = vsel %vm374, %v372, 0
  %v379 = vsel %vm374, %v373, 0
  %381 = vmatprep.subr.bf16.mxu0 0
  %382 = vmatpush1.bf16.xpose.msra.mxu0 %v379
  %383 = vmatprep.subr.bf16.mxu0 0
  %384 = vmatpush1.bf16.xpose.msra.mxu0 0
  %385 = vmatprep.subr.bf16.mxu0 0
  %386 = vmatpush1.bf16.xpose.msra.mxu0 0
  %387 = vmatprep.subr.bf16.mxu0 0
  %388 = vmatpush1.bf16.xpose.msra.mxu0 0
  %389 = vmatprep.subr.bf16.mxu0 0
  %390 = vmatpush1.bf16.xpose.msra.mxu0 0
  %391 = vmatprep.subr.bf16.mxu0 0
  %392 = vmatpush1.bf16.xpose.msra.mxu0 0
  %393 = vmatprep.subr.bf16.mxu0 0
  %394 = vmatpush1.bf16.xpose.msra.mxu0 0
  %395 = vmatprep.subr.bf16.mxu0 0
  %396 = vmatpush1.bf16.xpose.msra.mxu0 0
  %397 = vmatprep.subr.bf16.mxu0 0
  %398 = vmatpush1.bf16.xpose.msra.mxu0 0
  %399 = vmatprep.subr.bf16.mxu0 0
  %400 = vmatpush1.bf16.xpose.msra.mxu0 0
  %401 = vmatprep.subr.bf16.mxu0 0
  %402 = vmatpush1.bf16.xpose.msra.mxu0 0
  %403 = vmatprep.subr.bf16.mxu0 0
  %404 = vmatpush1.bf16.xpose.msra.mxu0 0
  %405 = vmatprep.subr.bf16.mxu0 0
  %406 = vmatpush1.bf16.xpose.msra.mxu0 0
  %407 = vmatprep.subr.bf16.mxu0 0
  %408 = vmatpush1.bf16.xpose.msra.mxu0 0
  %409 = vmatprep.subr.bf16.mxu0 0
  %410 = vmatpush1.bf16.xpose.msra.mxu0 0
  %411 = vmatprep.subr.bf16.mxu0 0
  %412 = vmatpush1.bf16.xpose.msra.mxu0 0
  %413 = vmatprep.mubr.bf16.mxu0 0
  %414 = vmatmul.mubr.bf16.gmra.mrb[0].mxu0 %v376
  %v415 = vpop.f32.mrb[0].mxu0
  %v416 = vadd.f32 %v21, %v415
  %v417 = vpop.f32.mrb[0].mxu0
  %v418 = vpop.f32.mrb[0].mxu0
  %v419 = vpop.f32.mrb[0].mxu0
  %420 = vdwg.mxu0
  %v421 = vsel %vm374, %v416, -inf
  %422 = vmax.xlane.f32.xlu0 %v421
  %v423 = vpop.xlane.xlu0 %422
  %v424 = vsub.f32 %v416, %v423
  %v425 = vmul.f32 %v424, 1.442695
  %v426 = vpow.pop %v425
  %v427 = vsel %vm374, %v426, 0.0
  %428 = vadd.xlane.f32.xlu0 %v427
  %v429 = vpop.xlane.xlu0 %428
  %v430 = vrcp.pop %v429
  %v431 = vmul.f32 %v426, %v430
  %v432 = vpack.c.bf16 %v431, %v431
  %v433 = vpack.c.bf16 %v366, %v366
  %v435 = vsel %vm374, %v432, 0
  %vm437 = vcmask 1043456
  %v439 = vsel %vm437, %v433, 0
  %441 = vmatprep.subr.bf16.mxu0 0
  %442 = vmatpush1.bf16.msra.mxu0 %v439
  %443 = vmatprep.subr.bf16.mxu0 0
  %444 = vmatpush1.bf16.msra.mxu0 0
  %445 = vmatprep.subr.bf16.mxu0 0
  %446 = vmatpush1.bf16.msra.mxu0 0
  %447 = vmatprep.subr.bf16.mxu0 0
  %448 = vmatpush1.bf16.msra.mxu0 0
  %449 = vmatprep.subr.bf16.mxu0 0
  %450 = vmatpush1.bf16.msra.mxu0 0
  %451 = vmatprep.subr.bf16.mxu0 0
  %452 = vmatpush1.bf16.msra.mxu0 0
  %453 = vmatprep.subr.bf16.mxu0 0
  %454 = vmatpush1.bf16.msra.mxu0 0
  %455 = vmatprep.subr.bf16.mxu0 0
  %456 = vmatpush1.bf16.msra.mxu0 0
  %457 = vmatprep.subr.bf16.mxu0 0
  %458 = vmatpush1.bf16.msra.mxu0 0
  %459 = vmatprep.subr.bf16.mxu0 0
  %460 = vmatpush1.bf16.msra.mxu0 0
  %461 = vmatprep.subr.bf16.mxu0 0
  %462 = vmatpush1.bf16.msra.mxu0 0
  %463 = vmatprep.subr.bf16.mxu0 0
  %464 = vmatpush1.bf16.msra.mxu0 0
  %465 = vmatprep.subr.bf16.mxu0 0
  %466 = vmatpush1.bf16.msra.mxu0 0
  %467 = vmatprep.subr.bf16.mxu0 0
  %468 = vmatpush1.bf16.msra.mxu0 0
  %469 = vmatprep.subr.bf16.mxu0 0
  %470 = vmatpush1.bf16.msra.mxu0 0
  %471 = vmatprep.subr.bf16.mxu0 0
  %472 = vmatpush1.bf16.msra.mxu0 0
  %473 = vmatprep.mubr.bf16.mxu0 0
  %474 = vmatmul.mubr.bf16.gmra.mrb[0].mxu0 %v435
  %v475 = vpop.f32.mrb[0].mxu0
  %v476 = vadd.f32 0.0, %v475
  %v477 = vpop.f32.mrb[0].mxu0
  %v478 = vpop.f32.mrb[0].mxu0
  %v479 = vpop.f32.mrb[0].mxu0
  %480 = vdwg.mxu0
  %v481 = vld [vmem:[%s1 + $0x60] sm:$0xf]
  %v482 = vpack.c.bf16 %v476, %v476
  %v484 = vsel %vm374, %v482, 0
  %v487 = vsel %vm437, %v481, 0
  %489 = vmatprep.subr.bf16.mxu0 0
  %490 = vmatpush1.bf16.msra.mxu0 %v487
  %491 = vmatprep.subr.bf16.mxu0 0
  %492 = vmatpush1.bf16.msra.mxu0 0
  %493 = vmatprep.subr.bf16.mxu0 0
  %494 = vmatpush1.bf16.msra.mxu0 0
  %495 = vmatprep.subr.bf16.mxu0 0
  %496 = vmatpush1.bf16.msra.mxu0 0
  %497 = vmatprep.subr.bf16.mxu0 0
  %498 = vmatpush1.bf16.msra.mxu0 0
  %499 = vmatprep.subr.bf16.mxu0 0
  %500 = vmatpush1.bf16.msra.mxu0 0
  %501 = vmatprep.subr.bf16.mxu0 0
  %502 = vmatpush1.bf16.msra.mxu0 0
  %503 = vmatprep.subr.bf16.mxu0 0
  %504 = vmatpush1.bf16.msra.mxu0 0
  %505 = vmatprep.subr.bf16.mxu0 0
  %506 = vmatpush1.bf16.msra.mxu0 0
  %507 = vmatprep.subr.bf16.mxu0 0
  %508 = vmatpush1.bf16.msra.mxu0 0
  %509 = vmatprep.subr.bf16.mxu0 0
  %510 = vmatpush1.bf16.msra.mxu0 0
  %511 = vmatprep.subr.bf16.mxu0 0
  %512 = vmatpush1.bf16.msra.mxu0 0
  %513 = vmatprep.subr.bf16.mxu0 0
  %514 = vmatpush1.bf16.msra.mxu0 0
  %515 = vmatprep.subr.bf16.mxu0 0
  %516 = vmatpush1.bf16.msra.mxu0 0
  %517 = vmatprep.subr.bf16.mxu0 0
  %518 = vmatpush1.bf16.msra.mxu0 0
  %519 = vmatprep.subr.bf16.mxu0 0
  %520 = vmatpush1.bf16.msra.mxu0 0
  %521 = vmatprep.mubr.bf16.mxu0 0
  %522 = vmatmul.mubr.bf16.gmra.mrb[0].mxu0 %v484
  %v523 = vpop.f32.mrb[0].mxu0
  %v524 = vadd.f32 0.0, %v523
  %v525 = vpop.f32.mrb[0].mxu0
  %v526 = vpop.f32.mrb[0].mxu0
  %v527 = vpop.f32.mrb[0].mxu0
  %528 = vdwg.mxu0
  %v529 = vadd.f32 %v371, %v524
  %531 = vrot.lane.b32.xlu0 %v372, 120
  %v532 = vpop.permute.xlu0 %531
  %534 = vrot.lane.b32.xlu0 %v373, 120
  %v535 = vpop.permute.xlu0 %534
  %v537 = vsel %vm374, %v532, 0
  %v540 = vsel %vm374, %v535, 0
  %542 = vmatprep.subr.bf16.mxu0 0
  %543 = vmatpush1.bf16.xpose.msra.mxu0 %v540
  %544 = vmatprep.subr.bf16.mxu0 0
  %545 = vmatpush1.bf16.xpose.msra.mxu0 0
  %546 = vmatprep.subr.bf16.mxu0 0
  %547 = vmatpush1.bf16.xpose.msra.mxu0 0
  %548 = vmatprep.subr.bf16.mxu0 0
  %549 = vmatpush1.bf16.xpose.msra.mxu0 0
  %550 = vmatprep.subr.bf16.mxu0 0
  %551 = vmatpush1.bf16.xpose.msra.mxu0 0
  %552 = vmatprep.subr.bf16.mxu0 0
  %553 = vmatpush1.bf16.xpose.msra.mxu0 0
  %554 = vmatprep.subr.bf16.mxu0 0
  %555 = vmatpush1.bf16.xpose.msra.mxu0 0
  %556 = vmatprep.subr.bf16.mxu0 0
  %557 = vmatpush1.bf16.xpose.msra.mxu0 0
  %558 = vmatprep.subr.bf16.mxu0 0
  %559 = vmatpush1.bf16.xpose.msra.mxu0 0
  %560 = vmatprep.subr.bf16.mxu0 0
  %561 = vmatpush1.bf16.xpose.msra.mxu0 0
  %562 = vmatprep.subr.bf16.mxu0 0
  %563 = vmatpush1.bf16.xpose.msra.mxu0 0
  %564 = vmatprep.subr.bf16.mxu0 0
  %565 = vmatpush1.bf16.xpose.msra.mxu0 0
  %566 = vmatprep.subr.bf16.mxu0 0
  %567 = vmatpush1.bf16.xpose.msra.mxu0 0
  %568 = vmatprep.subr.bf16.mxu0 0
  %569 = vmatpush1.bf16.xpose.msra.mxu0 0
  %570 = vmatprep.subr.bf16.mxu0 0
  %571 = vmatpush1.bf16.xpose.msra.mxu0 0
  %572 = vmatprep.subr.bf16.mxu0 0
  %573 = vmatpush1.bf16.xpose.msra.mxu0 0
  %574 = vmatprep.mubr.bf16.mxu0 0
  %575 = vmatmul.mubr.bf16.gmra.mrb[0].mxu0 %v537
  %v576 = vpop.f32.mrb[0].mxu0
  %v577 = vadd.f32 %v21, %v576
  %v578 = vpop.f32.mrb[0].mxu0
  %v579 = vpop.f32.mrb[0].mxu0
  %v580 = vpop.f32.mrb[0].mxu0
  %581 = vdwg.mxu0
  %v582 = vsel %vm374, %v577, -inf
  %583 = vmax.xlane.f32.xlu0 %v582
  %v584 = vpop.xlane.xlu0 %583
  %v585 = vsub.f32 %v577, %v584
  %v586 = vmul.f32 %v585, 1.442695
  %v587 = vpow.pop %v586
  %v588 = vsel %vm374, %v587, 0.0
  %589 = vadd.xlane.f32.xlu0 %v588
  %v590 = vpop.xlane.xlu0 %589
  %v591 = vrcp.pop %v590
  %v592 = vmul.f32 %v587, %v591
  %v593 = vpack.c.bf16 %v592, %v592
  %595 = vrot.lane.b32.xlu0 %v433, 120
  %v596 = vpop.permute.xlu0 %595
  %v598 = vsel %vm374, %v593, 0
  %v601 = vsel %vm437, %v596, 0
  %603 = vmatprep.subr.bf16.mxu0 0
  %604 = vmatpush1.bf16.msra.mxu0 %v601
  %605 = vmatprep.subr.bf16.mxu0 0
  %606 = vmatpush1.bf16.msra.mxu0 0
  %607 = vmatprep.subr.bf16.mxu0 0
  %608 = vmatpush1.bf16.msra.mxu0 0
  %609 = vmatprep.subr.bf16.mxu0 0
  %610 = vmatpush1.bf16.msra.mxu0 0
  %611 = vmatprep.subr.bf16.mxu0 0
  %612 = vmatpush1.bf16.msra.mxu0 0
  %613 = vmatprep.subr.bf16.mxu0 0
  %614 = vmatpush1.bf16.msra.mxu0 0
  %615 = vmatprep.subr.bf16.mxu0 0
  %616 = vmatpush1.bf16.msra.mxu0 0
  %617 = vmatprep.subr.bf16.mxu0 0
  %618 = vmatpush1.bf16.msra.mxu0 0
  %619 = vmatprep.subr.bf16.mxu0 0
  %620 = vmatpush1.bf16.msra.mxu0 0
  %621 = vmatprep.subr.bf16.mxu0 0
  %622 = vmatpush1.bf16.msra.mxu0 0
  %623 = vmatprep.subr.bf16.mxu0 0
  %624 = vmatpush1.bf16.msra.mxu0 0
  %625 = vmatprep.subr.bf16.mxu0 0
  %626 = vmatpush1.bf16.msra.mxu0 0
  %627 = vmatprep.subr.bf16.mxu0 0
  %628 = vmatpush1.bf16.msra.mxu0 0
  %629 = vmatprep.subr.bf16.mxu0 0
  %630 = vmatpush1.bf16.msra.mxu0 0
  %631 = vmatprep.subr.bf16.mxu0 0
  %632 = vmatpush1.bf16.msra.mxu0 0
  %633 = vmatprep.subr.bf16.mxu0 0
  %634 = vmatpush1.bf16.msra.mxu0 0
  %635 = vmatprep.mubr.bf16.mxu0 0
  %636 = vmatmul.mubr.bf16.gmra.mrb[0].mxu0 %v598
  %v637 = vpop.f32.mrb[0].mxu0
  %v638 = vadd.f32 0.0, %v637
  %v639 = vpop.f32.mrb[0].mxu0
  %v640 = vpop.f32.mrb[0].mxu0
  %v641 = vpop.f32.mrb[0].mxu0
  %642 = vdwg.mxu0
  %v643 = vld [vmem:[%s1 + $0x64] sm:$0xf]
  %v644 = vpack.c.bf16 %v638, %v638
  %v646 = vsel %vm374, %v644, 0
  %v649 = vsel %vm437, %v643, 0
  %651 = vmatprep.subr.bf16.mxu0 0
  %652 = vmatpush1.bf16.msra.mxu0 %v649
  %653 = vmatprep.subr.bf16.mxu0 0
  %654 = vmatpush1.bf16.msra.mxu0 0
  %655 = vmatprep.subr.bf16.mxu0 0
  %656 = vmatpush1.bf16.msra.mxu0 0
  %657 = vmatprep.subr.bf16.mxu0 0
  %658 = vmatpush1.bf16.msra.mxu0 0
  %659 = vmatprep.subr.bf16.mxu0 0
  %660 = vmatpush1.bf16.msra.mxu0 0
  %661 = vmatprep.subr.bf16.mxu0 0
  %662 = vmatpush1.bf16.msra.mxu0 0
  %663 = vmatprep.subr.bf16.mxu0 0
  %664 = vmatpush1.bf16.msra.mxu0 0
  %665 = vmatprep.subr.bf16.mxu0 0
  %666 = vmatpush1.bf16.msra.mxu0 0
  %667 = vmatprep.subr.bf16.mxu0 0
  %668 = vmatpush1.bf16.msra.mxu0 0
  %669 = vmatprep.subr.bf16.mxu0 0
  %670 = vmatpush1.bf16.msra.mxu0 0
  %671 = vmatprep.subr.bf16.mxu0 0
  %672 = vmatpush1.bf16.msra.mxu0 0
  %673 = vmatprep.subr.bf16.mxu0 0
  %674 = vmatpush1.bf16.msra.mxu0 0
  %675 = vmatprep.subr.bf16.mxu0 0
  %676 = vmatpush1.bf16.msra.mxu0 0
  %677 = vmatprep.subr.bf16.mxu0 0
  %678 = vmatpush1.bf16.msra.mxu0 0
  %679 = vmatprep.subr.bf16.mxu0 0
  %680 = vmatpush1.bf16.msra.mxu0 0
  %681 = vmatprep.subr.bf16.mxu0 0
  %682 = vmatpush1.bf16.msra.mxu0 0
  %683 = vmatprep.mubr.bf16.mxu0 0
  %684 = vmatmul.mubr.bf16.gmra.mrb[0].mxu0 %v646
  %v685 = vpop.f32.mrb[0].mxu0
  %v686 = vadd.f32 0.0, %v685
  %v687 = vpop.f32.mrb[0].mxu0
  %v688 = vpop.f32.mrb[0].mxu0
  %v689 = vpop.f32.mrb[0].mxu0
  %690 = vdwg.mxu0
  %v691 = vadd.f32 %v529, %v686
  %692 = vrot.lane.b32.xlu0 %v372, 112
  %v693 = vpop.permute.xlu0 %692
  %694 = vrot.lane.b32.xlu0 %v373, 112
  %v695 = vpop.permute.xlu0 %694
  %v697 = vsel %vm374, %v693, 0
  %v700 = vsel %vm374, %v695, 0
  %702 = vmatprep.subr.bf16.mxu0 0
  %703 = vmatpush1.bf16.xpose.msra.mxu0 %v700
  %704 = vmatprep.subr.bf16.mxu0 0
  %705 = vmatpush1.bf16.xpose.msra.mxu0 0
  %706 = vmatprep.subr.bf16.mxu0 0
  %707 = vmatpush1.bf16.xpose.msra.mxu0 0
  %708 = vmatprep.subr.bf16.mxu0 0
  %709 = vmatpush1.bf16.xpose.msra.mxu0 0
  %710 = vmatprep.subr.bf16.mxu0 0
  %711 = vmatpush1.bf16.xpose.msra.mxu0 0
  %712 = vmatprep.subr.bf16.mxu0 0
  %713 = vmatpush1.bf16.xpose.msra.mxu0 0
  %714 = vmatprep.subr.bf16.mxu0 0
  %715 = vmatpush1.bf16.xpose.msra.mxu0 0
  %716 = vmatprep.subr.bf16.mxu0 0
  %717 = vmatpush1.bf16.xpose.msra.mxu0 0
  %718 = vmatprep.subr.bf16.mxu0 0
  %719 = vmatpush1.bf16.xpose.msra.mxu0 0
  %720 = vmatprep.subr.bf16.mxu0 0
  %721 = vmatpush1.bf16.xpose.msra.mxu0 0
  %722 = vmatprep.subr.bf16.mxu0 0
  %723 = vmatpush1.bf16.xpose.msra.mxu0 0
  %724 = vmatprep.subr.bf16.mxu0 0
  %725 = vmatpush1.bf16.xpose.msra.mxu0 0
  %726 = vmatprep.subr.bf16.mxu0 0
  %727 = vmatpush1.bf16.xpose.msra.mxu0 0
  %728 = vmatprep.subr.bf16.mxu0 0
  %729 = vmatpush1.bf16.xpose.msra.mxu0 0
  %730 = vmatprep.subr.bf16.mxu0 0
  %731 = vmatpush1.bf16.xpose.msra.mxu0 0
  %732 = vmatprep.subr.bf16.mxu0 0
  %733 = vmatpush1.bf16.xpose.msra.mxu0 0
  %734 = vmatprep.mubr.bf16.mxu0 0
  %735 = vmatmul.mubr.bf16.gmra.mrb[0].mxu0 %v697
  %v736 = vpop.f32.mrb[0].mxu0
  %v737 = vadd.f32 %v21, %v736
  %v738 = vpop.f32.mrb[0].mxu0
  %v739 = vpop.f32.mrb[0].mxu0
  %v740 = vpop.f32.mrb[0].mxu0
  %741 = vdwg.mxu0
  %v742 = vsel %vm374, %v737, -inf
  %743 = vmax.xlane.f32.xlu0 %v742
  %v744 = vpop.xlane.xlu0 %743
  %v745 = vsub.f32 %v737, %v744
  %v746 = vmul.f32 %v745, 1.442695
  %v747 = vpow.pop %v746
  %v748 = vsel %vm374, %v747, 0.0
  %749 = vadd.xlane.f32.xlu0 %v748
  %v750 = vpop.xlane.xlu0 %749
  %v751 = vrcp.pop %v750
  %v752 = vmul.f32 %v747, %v751
  %v753 = vpack.c.bf16 %v752, %v752
  %754 = vrot.lane.b32.xlu0 %v433, 112
  %v755 = vpop.permute.xlu0 %754
  %v757 = vsel %vm374, %v753, 0
  %v760 = vsel %vm437, %v755, 0
  %762 = vmatprep.subr.bf16.mxu0 0
  %763 = vmatpush1.bf16.msra.mxu0 %v760
  %764 = vmatprep.subr.bf16.mxu0 0
  %765 = vmatpush1.bf16.msra.mxu0 0
  %766 = vmatprep.subr.bf16.mxu0 0
  %767 = vmatpush1.bf16.msra.mxu0 0
  %768 = vmatprep.subr.bf16.mxu0 0
  %769 = vmatpush1.bf16.msra.mxu0 0
  %770 = vmatprep.subr.bf16.mxu0 0
  %771 = vmatpush1.bf16.msra.mxu0 0
  %772 = vmatprep.subr.bf16.mxu0 0
  %773 = vmatpush1.bf16.msra.mxu0 0
  %774 = vmatprep.subr.bf16.mxu0 0
  %775 = vmatpush1.bf16.msra.mxu0 0
  %776 = vmatprep.subr.bf16.mxu0 0
  %777 = vmatpush1.bf16.msra.mxu0 0
  %778 = vmatprep.subr.bf16.mxu0 0
  %779 = vmatpush1.bf16.msra.mxu0 0
  %780 = vmatprep.subr.bf16.mxu0 0
  %781 = vmatpush1.bf16.msra.mxu0 0
  %782 = vmatprep.subr.bf16.mxu0 0
  %783 = vmatpush1.bf16.msra.mxu0 0
  %784 = vmatprep.subr.bf16.mxu0 0
  %785 = vmatpush1.bf16.msra.mxu0 0
  %786 = vmatprep.subr.bf16.mxu0 0
  %787 = vmatpush1.bf16.msra.mxu0 0
  %788 = vmatprep.subr.bf16.mxu0 0
  %789 = vmatpush1.bf16.msra.mxu0 0
  %790 = vmatprep.subr.bf16.mxu0 0
  %791 = vmatpush1.bf16.msra.mxu0 0
  %792 = vmatprep.subr.bf16.mxu0 0
  %793 = vmatpush1.bf16.msra.mxu0 0
  %794 = vmatprep.mubr.bf16.mxu0 0
  %795 = vmatmul.mubr.bf16.gmra.mrb[0].mxu0 %v757
  %v796 = vpop.f32.mrb[0].mxu0
  %v797 = vadd.f32 0.0, %v796
  %v798 = vpop.f32.mrb[0].mxu0
  %v799 = vpop.f32.mrb[0].mxu0
  %v800 = vpop.f32.mrb[0].mxu0
  %801 = vdwg.mxu0
  %v802 = vld [vmem:[%s1 + $0x68] sm:$0xf]
  %v803 = vpack.c.bf16 %v797, %v797
  %v805 = vsel %vm374, %v803, 0
  %v808 = vsel %vm437, %v802, 0
  %810 = vmatprep.subr.bf16.mxu0 0
  %811 = vmatpush1.bf16.msra.mxu0 %v808
  %812 = vmatprep.subr.bf16.mxu0 0
  %813 = vmatpush1.bf16.msra.mxu0 0
  %814 = vmatprep.subr.bf16.mxu0 0
  %815 = vmatpush1.bf16.msra.mxu0 0
  %816 = vmatprep.subr.bf16.mxu0 0
  %817 = vmatpush1.bf16.msra.mxu0 0
  %818 = vmatprep.subr.bf16.mxu0 0
  %819 = vmatpush1.bf16.msra.mxu0 0
  %820 = vmatprep.subr.bf16.mxu0 0
  %821 = vmatpush1.bf16.msra.mxu0 0
  %822 = vmatprep.subr.bf16.mxu0 0
  %823 = vmatpush1.bf16.msra.mxu0 0
  %824 = vmatprep.subr.bf16.mxu0 0
  %825 = vmatpush1.bf16.msra.mxu0 0
  %826 = vmatprep.subr.bf16.mxu0 0
  %827 = vmatpush1.bf16.msra.mxu0 0
  %828 = vmatprep.subr.bf16.mxu0 0
  %829 = vmatpush1.bf16.msra.mxu0 0
  %830 = vmatprep.subr.bf16.mxu0 0
  %831 = vmatpush1.bf16.msra.mxu0 0
  %832 = vmatprep.subr.bf16.mxu0 0
  %833 = vmatpush1.bf16.msra.mxu0 0
  %834 = vmatprep.subr.bf16.mxu0 0
  %835 = vmatpush1.bf16.msra.mxu0 0
  %836 = vmatprep.subr.bf16.mxu0 0
  %837 = vmatpush1.bf16.msra.mxu0 0
  %838 = vmatprep.subr.bf16.mxu0 0
  %839 = vmatpush1.bf16.msra.mxu0 0
  %840 = vmatprep.subr.bf16.mxu0 0
  %841 = vmatpush1.bf16.msra.mxu0 0
  %842 = vmatprep.mubr.bf16.mxu0 0
  %843 = vmatmul.mubr.bf16.gmra.mrb[0].mxu0 %v805
  %v844 = vpop.f32.mrb[0].mxu0
  %v845 = vadd.f32 0.0, %v844
  %v846 = vpop.f32.mrb[0].mxu0
  %v847 = vpop.f32.mrb[0].mxu0
  %v848 = vpop.f32.mrb[0].mxu0
  %849 = vdwg.mxu0
  %v850 = vadd.f32 %v691, %v845
  %851 = vrot.lane.b32.xlu0 %v372, 104
  %v852 = vpop.permute.xlu0 %851
  %853 = vrot.lane.b32.xlu0 %v373, 104
  %v854 = vpop.permute.xlu0 %853
  %v856 = vsel %vm374, %v852, 0
  %v859 = vsel %vm374, %v854, 0
  %861 = vmatprep.subr.bf16.mxu0 0
  %862 = vmatpush1.bf16.xpose.msra.mxu0 %v859
  %863 = vmatprep.subr.bf16.mxu0 0
  %864 = vmatpush1.bf16.xpose.msra.mxu0 0
  %865 = vmatprep.subr.bf16.mxu0 0
  %866 = vmatpush1.bf16.xpose.msra.mxu0 0
  %867 = vmatprep.subr.bf16.mxu0 0
  %868 = vmatpush1.bf16.xpose.msra.mxu0 0
  %869 = vmatprep.subr.bf16.mxu0 0
  %870 = vmatpush1.bf16.xpose.msra.mxu0 0
  %871 = vmatprep.subr.bf16.mxu0 0
  %872 = vmatpush1.bf16.xpose.msra.mxu0 0
  %873 = vmatprep.subr.bf16.mxu0 0
  %874 = vmatpush1.bf16.xpose.msra.mxu0 0
  %875 = vmatprep.subr.bf16.mxu0 0
  %876 = vmatpush1.bf16.xpose.msra.mxu0 0
  %877 = vmatprep.subr.bf16.mxu0 0
  %878 = vmatpush1.bf16.xpose.msra.mxu0 0
  %879 = vmatprep.subr.bf16.mxu0 0
  %880 = vmatpush1.bf16.xpose.msra.mxu0 0
  %881 = vmatprep.subr.bf16.mxu0 0
  %882 = vmatpush1.bf16.xpose.msra.mxu0 0
  %883 = vmatprep.subr.bf16.mxu0 0
  %884 = vmatpush1.bf16.xpose.msra.mxu0 0
  %885 = vmatprep.subr.bf16.mxu0 0
  %886 = vmatpush1.bf16.xpose.msra.mxu0 0
  %887 = vmatprep.subr.bf16.mxu0 0
  %888 = vmatpush1.bf16.xpose.msra.mxu0 0
  %889 = vmatprep.subr.bf16.mxu0 0
  %890 = vmatpush1.bf16.xpose.msra.mxu0 0
  %891 = vmatprep.subr.bf16.mxu0 0
  %892 = vmatpush1.bf16.xpose.msra.mxu0 0
  %893 = vmatprep.mubr.bf16.mxu0 0
  %894 = vmatmul.mubr.bf16.gmra.mrb[0].mxu0 %v856
  %v895 = vpop.f32.mrb[0].mxu0
  %v896 = vadd.f32 %v21, %v895
  %v897 = vpop.f32.mrb[0].mxu0
  %v898 = vpop.f32.mrb[0].mxu0
  %v899 = vpop.f32.mrb[0].mxu0
  %900 = vdwg.mxu0
  %v901 = vsel %vm374, %v896, -inf
  %902 = vmax.xlane.f32.xlu0 %v901
  %v903 = vpop.xlane.xlu0 %902
  %v904 = vsub.f32 %v896, %v903
  %v905 = vmul.f32 %v904, 1.442695
  %v906 = vpow.pop %v905
  %v907 = vsel %vm374, %v906, 0.0
  %908 = vadd.xlane.f32.xlu0 %v907
  %v909 = vpop.xlane.xlu0 %908
  %v910 = vrcp.pop %v909
  %v911 = vmul.f32 %v906, %v910
  %v912 = vpack.c.bf16 %v911, %v911
  %913 = vrot.lane.b32.xlu0 %v433, 104
  %v914 = vpop.permute.xlu0 %913
  %v916 = vsel %vm374, %v912, 0
  %v919 = vsel %vm437, %v914, 0
  %921 = vmatprep.subr.bf16.mxu0 0
  %922 = vmatpush1.bf16.msra.mxu0 %v919
  %923 = vmatprep.subr.bf16.mxu0 0
  %924 = vmatpush1.bf16.msra.mxu0 0
  %925 = vmatprep.subr.bf16.mxu0 0
  %926 = vmatpush1.bf16.msra.mxu0 0
  %927 = vmatprep.subr.bf16.mxu0 0
  %928 = vmatpush1.bf16.msra.mxu0 0
  %929 = vmatprep.subr.bf16.mxu0 0
  %930 = vmatpush1.bf16.msra.mxu0 0
  %931 = vmatprep.subr.bf16.mxu0 0
  %932 = vmatpush1.bf16.msra.mxu0 0
  %933 = vmatprep.subr.bf16.mxu0 0
  %934 = vmatpush1.bf16.msra.mxu0 0
  %935 = vmatprep.subr.bf16.mxu0 0
  %936 = vmatpush1.bf16.msra.mxu0 0
  %937 = vmatprep.subr.bf16.mxu0 0
  %938 = vmatpush1.bf16.msra.mxu0 0
  %939 = vmatprep.subr.bf16.mxu0 0
  %940 = vmatpush1.bf16.msra.mxu0 0
  %941 = vmatprep.subr.bf16.mxu0 0
  %942 = vmatpush1.bf16.msra.mxu0 0
  %943 = vmatprep.subr.bf16.mxu0 0
  %944 = vmatpush1.bf16.msra.mxu0 0
  %945 = vmatprep.subr.bf16.mxu0 0
  %946 = vmatpush1.bf16.msra.mxu0 0
  %947 = vmatprep.subr.bf16.mxu0 0
  %948 = vmatpush1.bf16.msra.mxu0 0
  %949 = vmatprep.subr.bf16.mxu0 0
  %950 = vmatpush1.bf16.msra.mxu0 0
  %951 = vmatprep.subr.bf16.mxu0 0
  %952 = vmatpush1.bf16.msra.mxu0 0
  %953 = vmatprep.mubr.bf16.mxu0 0
  %954 = vmatmul.mubr.bf16.gmra.mrb[0].mxu0 %v916
  %v955 = vpop.f32.mrb[0].mxu0
  %v956 = vadd.f32 0.0, %v955
  %v957 = vpop.f32.mrb[0].mxu0
  %v958 = vpop.f32.mrb[0].mxu0
  %v959 = vpop.f32.mrb[0].mxu0
  %960 = vdwg.mxu0
  %v961 = vld [vmem:[%s1 + $0x6c] sm:$0xf]
  %v962 = vpack.c.bf16 %v956, %v956
  %v964 = vsel %vm374, %v962, 0
  %v967 = vsel %vm437, %v961, 0
  %969 = vmatprep.subr.bf16.mxu0 0
  %970 = vmatpush1.bf16.msra.mxu0 %v967
  %971 = vmatprep.subr.bf16.mxu0 0
  %972 = vmatpush1.bf16.msra.mxu0 0
  %973 = vmatprep.subr.bf16.mxu0 0
  %974 = vmatpush1.bf16.msra.mxu0 0
  %975 = vmatprep.subr.bf16.mxu0 0
  %976 = vmatpush1.bf16.msra.mxu0 0
  %977 = vmatprep.subr.bf16.mxu0 0
  %978 = vmatpush1.bf16.msra.mxu0 0
  %979 = vmatprep.subr.bf16.mxu0 0
  %980 = vmatpush1.bf16.msra.mxu0 0
  %981 = vmatprep.subr.bf16.mxu0 0
  %982 = vmatpush1.bf16.msra.mxu0 0
  %983 = vmatprep.subr.bf16.mxu0 0
  %984 = vmatpush1.bf16.msra.mxu0 0
  %985 = vmatprep.subr.bf16.mxu0 0
  %986 = vmatpush1.bf16.msra.mxu0 0
  %987 = vmatprep.subr.bf16.mxu0 0
  %988 = vmatpush1.bf16.msra.mxu0 0
  %989 = vmatprep.subr.bf16.mxu0 0
  %990 = vmatpush1.bf16.msra.mxu0 0
  %991 = vmatprep.subr.bf16.mxu0 0
  %992 = vmatpush1.bf16.msra.mxu0 0
  %993 = vmatprep.subr.bf16.mxu0 0
  %994 = vmatpush1.bf16.msra.mxu0 0
  %995 = vmatprep.subr.bf16.mxu0 0
  %996 = vmatpush1.bf16.msra.mxu0 0
  %997 = vmatprep.subr.bf16.mxu0 0
  %998 = vmatpush1.bf16.msra.mxu0 0
  %999 = vmatprep.subr.bf16.mxu0 0
  %1000 = vmatpush1.bf16.msra.mxu0 0
  %1001 = vmatprep.mubr.bf16.mxu0 0
  %1002 = vmatmul.mubr.bf16.gmra.mrb[0].mxu0 %v964
  %v1003 = vpop.f32.mrb[0].mxu0
  %v1004 = vadd.f32 0.0, %v1003
  %v1005 = vpop.f32.mrb[0].mxu0
  %v1006 = vpop.f32.mrb[0].mxu0
  %v1007 = vpop.f32.mrb[0].mxu0
  %1008 = vdwg.mxu0
  %v1009 = vadd.f32 %v850, %v1004
  %v1010 = vsel %vm169, %v1009, 0.0
  %1011 = vadd.xlane.f32.xlu0 %v1010
  %v1012 = vpop.xlane.xlu0 %1011
  %v1013 = vmul.f32 %v1012, %v173
  %v1014 = vsub.f32 %v1009, %v1013
  %v1015 = vmul.f32 %v1014, %v1014
  %v1016 = vsel %vm169, %v1015, 0.0
  %1017 = vadd.xlane.f32.xlu0 %v1016
  %v1018 = vpop.xlane.xlu0 %1017
  %v1019 = vmul.f32 %v1018, %v173
  %v1020 = vadd.f32 %v1019, 1e-05
  %v1021 = vrsqrt.pop %v1020
  %v1022 = vmul.f32 %v1014, %v1021
  %v1023 = vlaneseq
  %v1024 = vshrl.u32 %v1023, 7
  %v1025 = vsub.s32 0, %v1024
  %v1026 = vrot.slane %v200, %v1025
  %v1027 = vmul.f32 %v1022, %v1026
  %v1028 = vlaneseq
  %v1029 = vshrl.u32 %v1028, 7
  %v1030 = vsub.s32 0, %v1029
  %v1031 = vrot.slane %v201, %v1030
  %v1032 = vadd.f32 %v1027, %v1031
  %v1033 = vld [vmem:[%s1 + $0x70] sm:$0xf]
  %v1034 = vld [vmem:[%s1 + $0x74] sm:$0xf]
  %v1035 = vld [vmem:[%s1 + $0x78] sm:$0xf]
  %v1036 = vld [vmem:[%s1 + $0x7c] sm:$0xf]
  %v1037 = vpack.c.bf16 %v1032, %v1032
  %v1038 = vlaneseq
  %v1039 = vshrl.u32 %v1038, 7
  %v1040 = vsub.s32 0, %v1039
  %v1041 = vrot.slane %v202, %v1040
  %v1046 = vunpack.c.l.b16 %v1033
  %v1047 = vunpack.c.l.b16 %v1034
  %v1048 = vunpack.c.l.b16 %v1035
  %v1049 = vunpack.c.l.b16 %v1036
  %v1050 = vpack.c.b16 %v1047, %v1046
  %v1051 = vpack.c.b16 %v1049, %v1048
  %v1055 = vsel %vm169, %v1037, 0
  %1057 = vmatprep.subr.bf16.mxu0 0
  %1058 = vmatpush1.bf16.msra.mxu0 %v1050
  %1059 = vmatprep.subr.bf16.mxu0 0
  %1060 = vmatpush1.bf16.msra.mxu0 %v1051
  %1061 = vmatprep.subr.bf16.mxu0 0
  %1062 = vmatpush1.bf16.msra.mxu0 0
  %1063 = vmatprep.subr.bf16.mxu0 0
  %1064 = vmatpush1.bf16.msra.mxu0 0
  %1065 = vmatprep.subr.bf16.mxu0 0
  %1066 = vmatpush1.bf16.msra.mxu0 0
  %1067 = vmatprep.subr.bf16.mxu0 0
  %1068 = vmatpush1.bf16.msra.mxu0 0
  %1069 = vmatprep.subr.bf16.mxu0 0
  %1070 = vmatpush1.bf16.msra.mxu0 0
  %1071 = vmatprep.subr.bf16.mxu0 0
  %1072 = vmatpush1.bf16.msra.mxu0 0
  %1073 = vmatprep.subr.bf16.mxu0 0
  %1074 = vmatpush1.bf16.msra.mxu0 0
  %1075 = vmatprep.subr.bf16.mxu0 0
  %1076 = vmatpush1.bf16.msra.mxu0 0
  %1077 = vmatprep.subr.bf16.mxu0 0
  %1078 = vmatpush1.bf16.msra.mxu0 0
  %1079 = vmatprep.subr.bf16.mxu0 0
  %1080 = vmatpush1.bf16.msra.mxu0 0
  %1081 = vmatprep.subr.bf16.mxu0 0
  %1082 = vmatpush1.bf16.msra.mxu0 0
  %1083 = vmatprep.subr.bf16.mxu0 0
  %1084 = vmatpush1.bf16.msra.mxu0 0
  %1085 = vmatprep.subr.bf16.mxu0 0
  %1086 = vmatpush1.bf16.msra.mxu0 0
  %1087 = vmatprep.subr.bf16.mxu0 0
  %1088 = vmatpush1.bf16.msra.mxu0 0
  %1089 = vmatprep.mubr.bf16.mxu0 0
  %1090 = vmatmul.mubr.bf16.gmra.mrb[0].mxu0 %v1055
  %v1091 = vpop.f32.mrb[0].mxu0
  %v1092 = vadd.f32 %v1041, %v1091
  %v1093 = vpop.f32.mrb[0].mxu0
  %v1094 = vpop.f32.mrb[0].mxu0
  %v1095 = vpop.f32.mrb[0].mxu0
  %1096 = vdwg.mxu0
  %v1097 = vmul.f32 %v1092, 1.702
  %v1098 = vxor.u32 %v1097, 2147483648
  %v1099 = vmul.f32 %v1098, 1.442695
  %v1100 = vpow.pop %v1099
  %v1101 = vadd.f32 %v1100, 1.0
  %v1102 = vrcp.pop %v1101
  %v1103 = vmul.f32 1.0, %v1102
  %v1104 = vmul.f32 %v1092, %v1103
  %v1105 = vld [vmem:[%s1 + $0x80] sm:$0xf]
  %v1106 = vld [vmem:[%s1 + $0x84] sm:$0xf]
  %v1107 = vld [vmem:[%s1 + $0x88] sm:$0xf]
  %v1108 = vld [vmem:[%s1 + $0x8c] sm:$0xf]
  %v1109 = vld [vmem:[%s1 + $0x90] sm:$0xf]
  %v1110 = vld [vmem:[%s1 + $0x94] sm:$0xf]
  %v1111 = vld [vmem:[%s1 + $0x98] sm:$0xf]
  %v1112 = vld [vmem:[%s1 + $0x9c] sm:$0xf]
  %v1113 = vpack.c.bf16 %v1104, %v1104
  %v1122 = vunpack.c.l.b16 %v1105
  %v1123 = vunpack.c.l.b16 %v1106
  %v1124 = vunpack.c.l.b16 %v1107
  %v1125 = vunpack.c.l.b16 %v1108
  %v1126 = vunpack.c.l.b16 %v1109
  %v1127 = vunpack.c.l.b16 %v1110
  %v1128 = vunpack.c.l.b16 %v1111
  %v1129 = vunpack.c.l.b16 %v1112
  %v1130 = vpack.c.b16 %v1123, %v1122
  %v1131 = vpack.c.b16 %v1125, %v1124
  %v1132 = vpack.c.b16 %v1127, %v1126
  %v1133 = vpack.c.b16 %v1129, %v1128
  %v1139 = vsel %vm125, %v1113, 0
  %1141 = vmatprep.subr.bf16.mxu0 0
  %1142 = vmatpush1.bf16.msra.mxu0 %v1130
  %1143 = vmatprep.subr.bf16.mxu0 0
  %1144 = vmatpush1.bf16.msra.mxu0 %v1131
  %1145 = vmatprep.subr.bf16.mxu0 0
  %1146 = vmatpush1.bf16.msra.mxu0 %v1132
  %1147 = vmatprep.subr.bf16.mxu0 0
  %1148 = vmatpush1.bf16.msra.mxu0 %v1133
  %1149 = vmatprep.subr.bf16.mxu0 0
  %1150 = vmatpush1.bf16.msra.mxu0 0
  %1151 = vmatprep.subr.bf16.mxu0 0
  %1152 = vmatpush1.bf16.msra.mxu0 0
  %1153 = vmatprep.subr.bf16.mxu0 0
  %1154 = vmatpush1.bf16.msra.mxu0 0
  %1155 = vmatprep.subr.bf16.mxu0 0
  %1156 = vmatpush1.bf16.msra.mxu0 0
  %1157 = vmatprep.subr.bf16.mxu0 0
  %1158 = vmatpush1.bf16.msra.mxu0 0
  %1159 = vmatprep.subr.bf16.mxu0 0
  %1160 = vmatpush1.bf16.msra.mxu0 0
  %1161 = vmatprep.subr.bf16.mxu0 0
  %1162 = vmatpush1.bf16.msra.mxu0 0
  %1163 = vmatprep.subr.bf16.mxu0 0
  %1164 = vmatpush1.bf16.msra.mxu0 0
  %1165 = vmatprep.subr.bf16.mxu0 0
  %1166 = vmatpush1.bf16.msra.mxu0 0
  %1167 = vmatprep.subr.bf16.mxu0 0
  %1168 = vmatpush1.bf16.msra.mxu0 0
  %1169 = vmatprep.subr.bf16.mxu0 0
  %1170 = vmatpush1.bf16.msra.mxu0 0
  %1171 = vmatprep.subr.bf16.mxu0 0
  %1172 = vmatpush1.bf16.msra.mxu0 0
  %1173 = vmatprep.mubr.bf16.mxu0 0
  %1174 = vmatmul.mubr.bf16.gmra.mrb[0].mxu0 %v1139
  %v1175 = vpop.f32.mrb[0].mxu0
  %v1176 = vadd.f32 0.0, %v1175
  %v1177 = vpop.f32.mrb[0].mxu0
  %v1178 = vpop.f32.mrb[0].mxu0
  %v1179 = vpop.f32.mrb[0].mxu0
  %1180 = vdwg.mxu0
  %v1181 = vadd.f32 %v1009, %v1176
  %v1182 = vlaneseq
  %v1183 = vshrl.u32 %v1182, 7
  %v1184 = vsub.s32 0, %v1183
  %v1185 = vrot.slane %v203, %v1184
  %v1186 = vadd.f32 %v1181, %v1185
  %v1187 = vld [vmem:[%s1 + $0xa0] sm:$0xf]
  %v1188 = vld [vmem:[%s1 + $0xa4] sm:$0xf]
  %v1189 = vld [vmem:[%s1 + $0xa8] sm:$0xf]
  %v1190 = vld [vmem:[%s1 + $0xac] sm:$0xf]
  %v1191 = vld [vmem:[%s1 + $0xb0] sm:$0xf]
  %v1192 = vld [vmem:[%s1 + $0xb4] sm:$0xf]
  %v1193 = vld [vmem:[%s1 + $0xb8] sm:$0xf]
  %v1194 = vld [vmem:[%s1 + $0xbc] sm:$0xf]
  %v1195 = vld [vmem:[%s1 + $0xc0] sm:$0xf]
  %v1196 = vld [vmem:[%s1 + $0xc4] sm:$0xf]
  %v1197 = vld [vmem:[%s1 + $0xc8] sm:$0xf]
  %v1198 = vld [vmem:[%s1 + $0xcc] sm:$0xf]
  %v1199 = vld [vmem:[%s3 + $0x14] sm:$0x1]
  %v1200 = vld [vmem:[%s3 + $0x15] sm:$0x1]
  %v1201 = vpack.c.bf16 %v1186, %v1186
  %v1202 = vlaneseq
  %v1203 = vshrl.u32 %v1202, 7
  %v1204 = vsub.s32 0, %v1203
  %v1205 = vrot.slane %v1199, %v1204
  %v1210 = vunpack.c.l.b16 %v1187
  %v1211 = vunpack.c.l.b16 %v1188
  %v1212 = vunpack.c.l.b16 %v1189
  %v1213 = vunpack.c.l.b16 %v1190
  %v1214 = vpack.c.b16 %v1211, %v1210
  %v1215 = vpack.c.b16 %v1213, %v1212
  %v1219 = vsel %vm169, %v1201, 0
  %1221 = vmatprep.subr.bf16.mxu0 0
  %1222 = vmatpush1.bf16.msra.mxu0 %v1214
  %1223 = vmatprep.subr.bf16.mxu0 0
  %1224 = vmatpush1.bf16.msra.mxu0 %v1215
  %1225 = vmatprep.subr.bf16.mxu0 0
  %1226 = vmatpush1.bf16.msra.mxu0 0
  %1227 = vmatprep.subr.bf16.mxu0 0
  %1228 = vmatpush1.bf16.msra.mxu0 0
  %1229 = vmatprep.subr.bf16.mxu0 0
  %1230 = vmatpush1.bf16.msra.mxu0 0
  %1231 = vmatprep.subr.bf16.mxu0 0
  %1232 = vmatpush1.bf16.msra.mxu0 0
  %1233 = vmatprep.subr.bf16.mxu0 0
  %1234 = vmatpush1.bf16.msra.mxu0 0
  %1235 = vmatprep.subr.bf16.mxu0 0
  %1236 = vmatpush1.bf16.msra.mxu0 0
  %1237 = vmatprep.subr.bf16.mxu0 0
  %1238 = vmatpush1.bf16.msra.mxu0 0
  %1239 = vmatprep.subr.bf16.mxu0 0
  %1240 = vmatpush1.bf16.msra.mxu0 0
  %1241 = vmatprep.subr.bf16.mxu0 0
  %1242 = vmatpush1.bf16.msra.mxu0 0
  %1243 = vmatprep.subr.bf16.mxu0 0
  %1244 = vmatpush1.bf16.msra.mxu0 0
  %1245 = vmatprep.subr.bf16.mxu0 0
  %1246 = vmatpush1.bf16.msra.mxu0 0
  %1247 = vmatprep.subr.bf16.mxu0 0
  %1248 = vmatpush1.bf16.msra.mxu0 0
  %1249 = vmatprep.subr.bf16.mxu0 0
  %1250 = vmatpush1.bf16.msra.mxu0 0
  %1251 = vmatprep.subr.bf16.mxu0 0
  %1252 = vmatpush1.bf16.msra.mxu0 0
  %1253 = vmatprep.mubr.bf16.mxu0 0
  %1254 = vmatmul.mubr.bf16.gmra.mrb[0].mxu0 %v1219
  %v1255 = vpop.f32.mrb[0].mxu0
  %v1256 = vadd.f32 %v1205, %v1255
  %v1257 = vpop.f32.mrb[0].mxu0
  %v1258 = vpop.f32.mrb[0].mxu0
  %v1259 = vpop.f32.mrb[0].mxu0
  %1260 = vdwg.mxu0
  %v1261 = vmul.f32 %v1256, %v1256
  %v1262 = vmul.f32 %v1256, %v1261
  %v1263 = vmul.f32 %v1262, 0.044715
  %v1264 = vadd.f32 %v1256, %v1263
  %v1265 = vmul.f32 %v1264, 0.7978846
  %v1266 = vtanh.pop %v1265
  %v1267 = vadd.f32 %v1266, 1.0
  %v1268 = vmul.f32 %v1267, 0.5
  %v1269 = vmul.f32 %v1256, %v1268
  %v1270 = vpack.c.bf16 %v1269, %v1269
  %v1271 = vlaneseq
  %v1272 = vshrl.u32 %v1271, 7
  %v1273 = vsub.s32 0, %v1272
  %v1274 = vrot.slane %v1200, %v1273
  %v1283 = vunpack.c.l.b16 %v1191
  %v1284 = vunpack.c.l.b16 %v1192
  %v1285 = vunpack.c.l.b16 %v1193
  %v1286 = vunpack.c.l.b16 %v1194
  %v1287 = vunpack.c.l.b16 %v1195
  %v1288 = vunpack.c.l.b16 %v1196
  %v1289 = vunpack.c.l.b16 %v1197
  %v1290 = vunpack.c.l.b16 %v1198
  %v1291 = vpack.c.b16 %v1284, %v1283
  %v1292 = vpack.c.b16 %v1286, %v1285
  %v1293 = vpack.c.b16 %v1288, %v1287
  %v1294 = vpack.c.b16 %v1290, %v1289
  %v1300 = vsel %vm125, %v1270, 0
  %1302 = vmatprep.subr.bf16.mxu0 0
  %1303 = vmatpush1.bf16.msra.mxu0 %v1291
  %1304 = vmatprep.subr.bf16.mxu0 0
  %1305 = vmatpush1.bf16.msra.mxu0 %v1292
  %1306 = vmatprep.subr.bf16.mxu0 0
  %1307 = vmatpush1.bf16.msra.mxu0 %v1293
  %1308 = vmatprep.subr.bf16.mxu0 0
  %1309 = vmatpush1.bf16.msra.mxu0 %v1294
  %1310 = vmatprep.subr.bf16.mxu0 0
  %1311 = vmatpush1.bf16.msra.mxu0 0
  %1312 = vmatprep.subr.bf16.mxu0 0
  %1313 = vmatpush1.bf16.msra.mxu0 0
  %1314 = vmatprep.subr.bf16.mxu0 0
  %1315 = vmatpush1.bf16.msra.mxu0 0
  %1316 = vmatprep.subr.bf16.mxu0 0
  %1317 = vmatpush1.bf16.msra.mxu0 0
  %1318 = vmatprep.subr.bf16.mxu0 0
  %1319 = vmatpush1.bf16.msra.mxu0 0
  %1320 = vmatprep.subr.bf16.mxu0 0
  %1321 = vmatpush1.bf16.msra.mxu0 0
  %1322 = vmatprep.subr.bf16.mxu0 0
  %1323 = vmatpush1.bf16.msra.mxu0 0
  %1324 = vmatprep.subr.bf16.mxu0 0
  %1325 = vmatpush1.bf16.msra.mxu0 0
  %1326 = vmatprep.subr.bf16.mxu0 0
  %1327 = vmatpush1.bf16.msra.mxu0 0
  %1328 = vmatprep.subr.bf16.mxu0 0
  %1329 = vmatpush1.bf16.msra.mxu0 0
  %1330 = vmatprep.subr.bf16.mxu0 0
  %1331 = vmatpush1.bf16.msra.mxu0 0
  %1332 = vmatprep.subr.bf16.mxu0 0
  %1333 = vmatpush1.bf16.msra.mxu0 0
  %1334 = vmatprep.mubr.bf16.mxu0 0
  %1335 = vmatmul.mubr.bf16.gmra.mrb[0].mxu0 %v1300
  %v1336 = vpop.f32.mrb[0].mxu0
  %v1337 = vadd.f32 %v1274, %v1336
  %v1338 = vpop.f32.mrb[0].mxu0
  %v1339 = vpop.f32.mrb[0].mxu0
  %v1340 = vpop.f32.mrb[0].mxu0
  %1341 = vdwg.mxu0
  %1342 = vst [vmem:[%s4] sm:$0xff] %v1337
  // Predicated region
  $region18: #{llava_forward.1} parent=0 // pred_check
    _
  $region19: #{llava_forward.1} parent=0 // pred_check_branch
    %1344 = sbr.rel (0) target = $region21
  $region20: #{llava_forward.1} parent=0 // pred_region
    _
  $region21: #{llava_forward.1} parent=0 // pred_fallthru
    _
  // Predicated region
  $region22: #{llava_forward.1} parent=0 // pred_check
    _
  $region23: #{llava_forward.1} parent=0 // pred_check_branch
    %1346 = sbr.rel (0) target = $region25
  $region24: #{llava_forward.1} parent=0 // pred_region
    _
  $region25: #{llava_forward.1} parent=0 // pred_fallthru
    _

</llo_original>
